<compile_context>
chip_gen: v7x
topology: tpu7x:2x2x1
jax: 0.10.0
libtpu: 0.0.40
codegen_flags: <defaults>
</compile_context>

<pallas_src>
import jax
import jax.numpy as jnp
from jax.experimental import pallas as pl
from jax.experimental.pallas import tpu as pltpu

_LANE = 128


def _round_up(n, m):
    return ((n + m - 1) // m) * m


def _default_compute_dtype():
    """bf16 MXU inputs on v6e/v7x; f32 on v5e and older (no bf16 VPU/EUP there)."""
    try:
        kind = jax.devices()[0].device_kind.lower()
    except Exception:
        return jnp.float32
    if any(tag in kind for tag in ("v2", "v3", "v4", "v5")):
        return jnp.float32
    return jnp.bfloat16


def sharp_encoder_kernel(x_ref,
                         w0_ref, b0_ref,
                         w1_ref, b1_ref,
                         we_ref, be_ref,
                         wf_ref, bf_ref,
                         y_ref, z_ref):
    """Fused 4-layer MLP: (Linear+ReLU) x2 -> Linear+ReLU (znn) -> Linear (ynn).

    Matmuls run on the MXU in the weights' storage dtype (f32 or bf16) with f32
    accumulation; bias-add / ReLU are done in f32 on the VPU.  Dropout layers of
    the PyTorch module are identity at inference and therefore omitted.
    """
    cdt = w0_ref.dtype  # MXU input dtype (f32 or bf16)

    # hidden layer 0: Linear -> ReLU   (Dropout(base_dropout) = identity in eval)
    h = jnp.dot(x_ref[...], w0_ref[...], preferred_element_type=jnp.float32)
    h = jnp.maximum(h + b0_ref[...], 0.0)
    # hidden layer 1: Linear -> ReLU   (Dropout(base_dropout) = identity in eval)
    h = jnp.dot(h.astype(cdt), w1_ref[...], preferred_element_type=jnp.float32)
    h = jnp.maximum(h + b1_ref[...], 0.0)
    # encoder output layer: Linear -> ReLU  -> znn  (columns lane-padded to 128)
    z = jnp.dot(h.astype(cdt), we_ref[...], preferred_element_type=jnp.float32)
    z = jnp.maximum(z + be_ref[...], 0.0)
    # decoder / final layer: plain Linear -> ynn    (columns lane-padded to 128)
    y = jnp.dot(z.astype(cdt), wf_ref[...], preferred_element_type=jnp.float32)
    y = y + bf_ref[...]

    z_ref[...] = z.astype(z_ref.dtype)
    y_ref[...] = y.astype(y_ref.dtype)


def sharp_encoder(x, params, *, batch_tile=512, compute_dtype=None):
    """Fused forward pass.  Returns (ynn, znn)."""
    (w0, b0), (w1, b1), (we, be), (wf, bf) = params
    B, in_dim = x.shape
    h0 = w0.shape[1]
    h1 = w1.shape[1]
    enc = we.shape[1]
    dec = wf.shape[1]

    if compute_dtype is None:
        compute_dtype = _default_compute_dtype()

    # --- lane-dense outputs: zero-pad encoder/decoder columns up to 128 ---------
    enc_p = _round_up(enc, _LANE)
    dec_p = _round_up(dec, _LANE)
    we_p = jnp.zeros((h1, enc_p), compute_dtype).at[:, :enc].set(we.astype(compute_dtype))
    be_p = jnp.zeros((1, enc_p), jnp.float32).at[:, :enc].set(be.astype(jnp.float32))
    wf_p = jnp.zeros((enc_p, dec_p), compute_dtype).at[:enc, :dec].set(wf.astype(compute_dtype))
    bf_p = jnp.zeros((1, dec_p), jnp.float32).at[:, :dec].set(bf.astype(jnp.float32))

    # --- cast MXU inputs (weights + x); keep biases f32 -------------------------
    xc = x.astype(compute_dtype)
    w0c = w0.astype(compute_dtype)
    w1c = w1.astype(compute_dtype)
    b0c = b0.astype(jnp.float32)
    b1c = b1.astype(jnp.float32)

    # Batch is the only tiled axis; for v7x prefer batch_tile <= B/2 so the grid
    # has >= 2 "parallel" steps and both TensorCores get work.
    tb = min(batch_tile, B)
    grid = (pl.cdiv(B, tb),)

    # Weight / bias blocks are full arrays replicated across the batch grid
    # (constant index_map -> no re-DMA across grid steps).
    # TODO(synk): pipeline_mode=pl.Buffered(1) on these would drop their second
    # VMEM buffer; skipped since the full weight set is <100 KB.
    def rep(a):
        nd = a.ndim
        return pl.BlockSpec(a.shape, lambda i, _nd=nd: (0,) * _nd)

    in_specs = [
        pl.BlockSpec((tb, in_dim), lambda i: (i, 0)),   # x tile
        rep(w0c), rep(b0c),
        rep(w1c), rep(b1c),
        rep(we_p), rep(be_p),
        rep(wf_p), rep(bf_p),
    ]
    out_specs = [
        pl.BlockSpec((tb, dec_p), lambda i: (i, 0)),    # ynn tile (padded)
        pl.BlockSpec((tb, enc_p), lambda i: (i, 0)),    # znn tile (padded)
    ]

    flops = 2 * B * (in_dim * h0 + h0 * h1 + h1 * enc_p + enc_p * dec_p)
    bytes_accessed = (
        xc.size * xc.dtype.itemsize
        + sum(a.size * a.dtype.itemsize
              for a in (w0c, b0c, w1c, b1c, we_p, be_p, wf_p, bf_p))
        + B * (enc_p + dec_p) * 4
    )
    cost = pl.CostEstimate(flops=flops, transcendentals=0,
                           bytes_accessed=bytes_accessed)

    y_p, z_p = pl.pallas_call(
        sharp_encoder_kernel,
        out_shape=(jax.ShapeDtypeStruct((B, dec_p), jnp.float32),
                   jax.ShapeDtypeStruct((B, enc_p), jnp.float32)),
        grid_spec=pl.GridSpec(
            grid=grid,
            in_specs=in_specs,
            out_specs=out_specs,
        ),
        compiler_params=pltpu.CompilerParams(
            dimension_semantics=("parallel",),
            vmem_limit_bytes=48 * 1024 * 1024,   # safe on v5e/v6e (128 MiB) and v7x (64 MiB)
        ),
        cost_estimate=cost,
    )(xc, w0c, b0c, w1c, b1c, we_p, be_p, wf_p, bf_p)

    # Slice off the lane-padding (padded columns are exactly zero).
    return y_p[:, :dec], z_p[:, :enc]


def init_linear(key, in_features, out_features):
    """Deterministic init mimicking PyTorch Linear default (uniform +/- 1/sqrt(fan_in)).
    Weight stored as (in_features, out_features), bias as (1, out_features)."""
    kw, kb = jax.random.split(key)
    bound = 1.0 / jnp.sqrt(jnp.float32(in_features))
    w = jax.random.uniform(kw, (in_features, out_features), jnp.float32,
                           minval=-bound, maxval=bound)
    b = jax.random.uniform(kb, (1, out_features), jnp.float32,
                           minval=-bound, maxval=bound)
    return w, b


def reference_forward(x, params, compute_dtype=jnp.float32):
    """Plain-JAX reference of the PyTorch forward (eval mode), with the same
    matmul-input dtype / f32 accumulation as the kernel."""
    (w0, b0), (w1, b1), (we, be), (wf, bf) = params
    cdt = compute_dtype
    h = jnp.maximum(jnp.dot(x.astype(cdt), w0.astype(cdt),
                            preferred_element_type=jnp.float32) + b0, 0.0)
    h = jnp.maximum(jnp.dot(h.astype(cdt), w1.astype(cdt),
                            preferred_element_type=jnp.float32) + b1, 0.0)
    z = jnp.maximum(jnp.dot(h.astype(cdt), we.astype(cdt),
                            preferred_element_type=jnp.float32) + be, 0.0)
    y = jnp.dot(z.astype(cdt), wf.astype(cdt),
                preferred_element_type=jnp.float32) + bf
    return y, z


if __name__ == "__main__":
    # SharpEncoder(input_size=32, hidden_sizes=[64, 64],
    #              encoder_output_size=32, decoder_output_size=16,
    #              active_end=False)  -- dropout is identity at inference.
    input_size = 32
    hidden_sizes = [64, 64]
    encoder_output_size = 32
    decoder_output_size = 16
    batch = 1024            # -> two 512-row grid steps (megacore split on v7x)

    key = jax.random.PRNGKey(0)
    kx, k0, k1, k2, k3 = jax.random.split(key, 5)

    x = jax.random.normal(kx, (batch, input_size), jnp.float32)

    params = (
        init_linear(k0, input_size, hidden_sizes[0]),
        init_linear(k1, hidden_sizes[0], hidden_sizes[1]),
        init_linear(k2, hidden_sizes[1], encoder_output_size),
        init_linear(k3, encoder_output_size, decoder_output_size),
    )

    cdt = _default_compute_dtype()
    ynn, znn = sharp_encoder(x, params, batch_tile=512, compute_dtype=cdt)
    ynn = jax.block_until_ready(ynn)
    znn = jax.block_until_ready(znn)

    y_ref, z_ref = reference_forward(x, params, compute_dtype=cdt)
    tol = 1e-5 if cdt == jnp.float32 else 2e-2
    assert jnp.allclose(ynn, y_ref, atol=tol, rtol=tol), \
        float(jnp.max(jnp.abs(ynn - y_ref)))
    assert jnp.allclose(znn, z_ref, atol=tol, rtol=tol), \
        float(jnp.max(jnp.abs(znn - z_ref)))
    assert ynn.shape == (batch, decoder_output_size)
    assert znn.shape == (batch, encoder_output_size)

    print("KERNEL_OK")
</pallas_src>

<mosaic_0001>
module attributes {stable_mosaic.version = 11 : i64} {
  func.func @sharp_encoder_kernel(%arg0: i32, %arg1: memref<512x32xbf16, #tpu.memory_space<vmem>>, %arg2: memref<32x64xbf16, #tpu.memory_space<vmem>>, %arg3: memref<1x64xf32, #tpu.memory_space<vmem>>, %arg4: memref<64x64xbf16, #tpu.memory_space<vmem>>, %arg5: memref<1x64xf32, #tpu.memory_space<vmem>>, %arg6: memref<64x128xbf16, #tpu.memory_space<vmem>>, %arg7: memref<1x128xf32, #tpu.memory_space<vmem>>, %arg8: memref<128x128xbf16, #tpu.memory_space<vmem>>, %arg9: memref<1x128xf32, #tpu.memory_space<vmem>>, %arg10: memref<512x128xf32, #tpu.memory_space<vmem>>, %arg11: memref<512x128xf32, #tpu.memory_space<vmem>>) attributes {dimension_semantics = [#tpu.dimension_semantics<parallel>], iteration_bounds = array<i64: 2>, scalar_prefetch = 0 : i64, scratch_operands = 0 : i64, tpu.core_type = #tpu.core_type<tc>, window_params = [{transform_indices = @transform_0, window_bounds = array<i64: 512, 32>}, {pipeline_mode = #tpu.pipeline_mode<synchronous>, transform_indices = @transform_1, window_bounds = array<i64: 32, 64>}, {pipeline_mode = #tpu.pipeline_mode<synchronous>, transform_indices = @transform_2, window_bounds = array<i64: 1, 64>}, {pipeline_mode = #tpu.pipeline_mode<synchronous>, transform_indices = @transform_3, window_bounds = array<i64: 64, 64>}, {pipeline_mode = #tpu.pipeline_mode<synchronous>, transform_indices = @transform_4, window_bounds = array<i64: 1, 64>}, {pipeline_mode = #tpu.pipeline_mode<synchronous>, transform_indices = @transform_5, window_bounds = array<i64: 64, 128>}, {pipeline_mode = #tpu.pipeline_mode<synchronous>, transform_indices = @transform_6, window_bounds = array<i64: 1, 128>}, {pipeline_mode = #tpu.pipeline_mode<synchronous>, transform_indices = @transform_7, window_bounds = array<i64: 128, 128>}, {pipeline_mode = #tpu.pipeline_mode<synchronous>, transform_indices = @transform_8, window_bounds = array<i64: 1, 128>}, {transform_indices = @transform_9, window_bounds = array<i64: 512, 128>}, {transform_indices = @transform_10, window_bounds = array<i64: 512, 128>}]} {
    %c0 = arith.constant 0 : index
    %c0_0 = arith.constant 0 : index
    %0 = vector.load %arg1[%c0, %c0_0] : memref<512x32xbf16, #tpu.memory_space<vmem>>, vector<512x32xbf16>
    %c0_1 = arith.constant 0 : index
    %c0_2 = arith.constant 0 : index
    %1 = vector.load %arg2[%c0_1, %c0_2] : memref<32x64xbf16, #tpu.memory_space<vmem>>, vector<32x64xbf16>
    %cst = arith.constant dense<0.000000e+00> : vector<512x64xf32>
    %2 = tpu.matmul %0, %1, %cst {dimension_numbers = #tpu.dot_dimension_numbers<[1], [0], [0], [1], [0, 0, 1, 1], [], []>} : vector<512x32xbf16>, vector<32x64xbf16>, vector<512x64xf32> -> vector<512x64xf32>
    %c0_3 = arith.constant 0 : index
    %c0_4 = arith.constant 0 : index
    %3 = vector.load %arg3[%c0_3, %c0_4] : memref<1x64xf32, #tpu.memory_space<vmem>>, vector<1x64xf32>
    %4 = vector.broadcast %3 : vector<1x64xf32> to vector<512x64xf32>
    %5 = arith.addf %2, %4 : vector<512x64xf32>
    %cst_5 = arith.constant 0.000000e+00 : f32
    %6 = vector.broadcast %cst_5 : f32 to vector<512x64xf32>
    %7 = arith.maximumf %5, %6 : vector<512x64xf32>
    %8 = arith.truncf %7 : vector<512x64xf32> to vector<512x64xbf16>
    %c0_6 = arith.constant 0 : index
    %c0_7 = arith.constant 0 : index
    %9 = vector.load %arg4[%c0_6, %c0_7] : memref<64x64xbf16, #tpu.memory_space<vmem>>, vector<64x64xbf16>
    %cst_8 = arith.constant dense<0.000000e+00> : vector<512x64xf32>
    %10 = tpu.matmul %8, %9, %cst_8 {dimension_numbers = #tpu.dot_dimension_numbers<[1], [0], [0], [1], [0, 0, 1, 1], [], []>} : vector<512x64xbf16>, vector<64x64xbf16>, vector<512x64xf32> -> vector<512x64xf32>
    %c0_9 = arith.constant 0 : index
    %c0_10 = arith.constant 0 : index
    %11 = vector.load %arg5[%c0_9, %c0_10] : memref<1x64xf32, #tpu.memory_space<vmem>>, vector<1x64xf32>
    %12 = vector.broadcast %11 : vector<1x64xf32> to vector<512x64xf32>
    %13 = arith.addf %10, %12 : vector<512x64xf32>
    %cst_11 = arith.constant 0.000000e+00 : f32
    %14 = vector.broadcast %cst_11 : f32 to vector<512x64xf32>
    %15 = arith.maximumf %13, %14 : vector<512x64xf32>
    %16 = arith.truncf %15 : vector<512x64xf32> to vector<512x64xbf16>
    %c0_12 = arith.constant 0 : index
    %c0_13 = arith.constant 0 : index
    %17 = vector.load %arg6[%c0_12, %c0_13] : memref<64x128xbf16, #tpu.memory_space<vmem>>, vector<64x128xbf16>
    %cst_14 = arith.constant dense<0.000000e+00> : vector<512x128xf32>
    %18 = tpu.matmul %16, %17, %cst_14 {dimension_numbers = #tpu.dot_dimension_numbers<[1], [0], [0], [1], [0, 0, 1, 1], [], []>} : vector<512x64xbf16>, vector<64x128xbf16>, vector<512x128xf32> -> vector<512x128xf32>
    %c0_15 = arith.constant 0 : index
    %c0_16 = arith.constant 0 : index
    %19 = vector.load %arg7[%c0_15, %c0_16] : memref<1x128xf32, #tpu.memory_space<vmem>>, vector<1x128xf32>
    %20 = vector.broadcast %19 : vector<1x128xf32> to vector<512x128xf32>
    %21 = arith.addf %18, %20 : vector<512x128xf32>
    %cst_17 = arith.constant 0.000000e+00 : f32
    %22 = vector.broadcast %cst_17 : f32 to vector<512x128xf32>
    %23 = arith.maximumf %21, %22 : vector<512x128xf32>
    %24 = arith.truncf %23 : vector<512x128xf32> to vector<512x128xbf16>
    %c0_18 = arith.constant 0 : index
    %c0_19 = arith.constant 0 : index
    %25 = vector.load %arg8[%c0_18, %c0_19] : memref<128x128xbf16, #tpu.memory_space<vmem>>, vector<128x128xbf16>
    %cst_20 = arith.constant dense<0.000000e+00> : vector<512x128xf32>
    %26 = tpu.matmul %24, %25, %cst_20 {dimension_numbers = #tpu.dot_dimension_numbers<[1], [0], [0], [1], [0, 0, 1, 1], [], []>} : vector<512x128xbf16>, vector<128x128xbf16>, vector<512x128xf32> -> vector<512x128xf32>
    %c0_21 = arith.constant 0 : index
    %c0_22 = arith.constant 0 : index
    %27 = vector.load %arg9[%c0_21, %c0_22] : memref<1x128xf32, #tpu.memory_space<vmem>>, vector<1x128xf32>
    %28 = vector.broadcast %27 : vector<1x128xf32> to vector<512x128xf32>
    %29 = arith.addf %26, %28 : vector<512x128xf32>
    %c0_23 = arith.constant 0 : index
    %c0_24 = arith.constant 0 : index
    %30 = vector.load %arg11[%c0_23, %c0_24] : memref<512x128xf32, #tpu.memory_space<vmem>>, vector<512x128xf32>
    tpu.vector_store %arg11[%c0_23, %c0_24], %23 {strides = array<i32>} : memref<512x128xf32, #tpu.memory_space<vmem>>, vector<512x128xf32>,
    %c0_25 = arith.constant 0 : index
    %c0_26 = arith.constant 0 : index
    %31 = vector.load %arg10[%c0_25, %c0_26] : memref<512x128xf32, #tpu.memory_space<vmem>>, vector<512x128xf32>
    tpu.vector_store %arg10[%c0_25, %c0_26], %29 {strides = array<i32>} : memref<512x128xf32, #tpu.memory_space<vmem>>, vector<512x128xf32>,
    return
  }
  func.func @transform_0(%arg0: i32) -> (i32, i32) {
    %c0_i32 = arith.constant 0 : i32
    %c0_i32_0 = arith.constant 0 : i32
    return %arg0, %c0_i32 : i32, i32
  }
  func.func @transform_1(%arg0: i32) -> (i32, i32) {
    %c0_i32 = arith.constant 0 : i32
    %c0_i32_0 = arith.constant 0 : i32
    %c0_i32_1 = arith.constant 0 : i32
    return %c0_i32, %c0_i32_0 : i32, i32
  }
  func.func @transform_2(%arg0: i32) -> (i32, i32) {
    %c0_i32 = arith.constant 0 : i32
    %c0_i32_0 = arith.constant 0 : i32
    %c0_i32_1 = arith.constant 0 : i32
    return %c0_i32, %c0_i32_0 : i32, i32
  }
  func.func @transform_3(%arg0: i32) -> (i32, i32) {
    %c0_i32 = arith.constant 0 : i32
    %c0_i32_0 = arith.constant 0 : i32
    %c0_i32_1 = arith.constant 0 : i32
    return %c0_i32, %c0_i32_0 : i32, i32
  }
  func.func @transform_4(%arg0: i32) -> (i32, i32) {
    %c0_i32 = arith.constant 0 : i32
    %c0_i32_0 = arith.constant 0 : i32
    %c0_i32_1 = arith.constant 0 : i32
    return %c0_i32, %c0_i32_0 : i32, i32
  }
  func.func @transform_5(%arg0: i32) -> (i32, i32) {
    %c0_i32 = arith.constant 0 : i32
    %c0_i32_0 = arith.constant 0 : i32
    %c0_i32_1 = arith.constant 0 : i32
    return %c0_i32, %c0_i32_0 : i32, i32
  }
  func.func @transform_6(%arg0: i32) -> (i32, i32) {
    %c0_i32 = arith.constant 0 : i32
    %c0_i32_0 = arith.constant 0 : i32
    %c0_i32_1 = arith.constant 0 : i32
    return %c0_i32, %c0_i32_0 : i32, i32
  }
  func.func @transform_7(%arg0: i32) -> (i32, i32) {
    %c0_i32 = arith.constant 0 : i32
    %c0_i32_0 = arith.constant 0 : i32
    %c0_i32_1 = arith.constant 0 : i32
    return %c0_i32, %c0_i32_0 : i32, i32
  }
  func.func @transform_8(%arg0: i32) -> (i32, i32) {
    %c0_i32 = arith.constant 0 : i32
    %c0_i32_0 = arith.constant 0 : i32
    %c0_i32_1 = arith.constant 0 : i32
    return %c0_i32, %c0_i32_0 : i32, i32
  }
  func.func @transform_9(%arg0: i32) -> (i32, i32) {
    %c0_i32 = arith.constant 0 : i32
    %c0_i32_0 = arith.constant 0 : i32
    return %arg0, %c0_i32 : i32, i32
  }
  func.func @transform_10(%arg0: i32) -> (i32, i32) {
    %c0_i32 = arith.constant 0 : i32
    %c0_i32_0 = arith.constant 0 : i32
    return %arg0, %c0_i32 : i32, i32
  }
}

</mosaic_0001>

<llo_original>
// kernel: tpu_custom_call.1
$region0: #{tpu_custom_call.1}
  #allocation0 [shape = 'u32[]', space=smem, size = 0x4, offset = 0x4, fixed_abs, tag = 'smem constant byte address 0x4 - core index']
  #allocation1 [shape = 'u32[144,128]{1,0:T(1,128)}', space=vmem, size = 0x12000, scoped, tag = 'internal scratch']
  %s0 = inlined_call_operand.vmem [shape: bf16[1024,32], index: 0, kind: input, shape index: {}]
  %s1 = inlined_call_operand.vmem [shape: bf16[32,64], index: 1, kind: input, shape index: {}]
  %s2 = inlined_call_operand.vmem [shape: f32[1,64], index: 2, kind: input, shape index: {}]
  %s3 = inlined_call_operand.vmem [shape: bf16[64,64], index: 3, kind: input, shape index: {}]
  %s4 = inlined_call_operand.vmem [shape: f32[1,64], index: 4, kind: input, shape index: {}]
  %s5 = inlined_call_operand.vmem [shape: bf16[64,128], index: 5, kind: input, shape index: {}]
  %s6 = inlined_call_operand.vmem [shape: f32[1,128], index: 6, kind: input, shape index: {}]
  %s7 = inlined_call_operand.vmem [shape: bf16[128,128], index: 7, kind: input, shape index: {}]
  %s8 = inlined_call_operand.vmem [shape: f32[1,128], index: 8, kind: input, shape index: {}]
  %s9 = inlined_call_operand.hbm [shape: f32[1024,128], index: 9, kind: output, shape index: {0}]
  %s10 = inlined_call_operand.hbm [shape: f32[1024,128], index: 10, kind: output, shape index: {1}]
  %11 = xla_tuple %s9, %s10
  %s12 = sld [smem:[#allocation0]]
  $region77: #{tpu_custom_call.1} parent=0
    _
  %s14 = ssub.s32 1, %s12
  %s15 = scalar_select 0, %s14, %s12
  $region1: #{tpu_custom_call.1} parent=0
    #allocation2 [shape = 'u8[524288]{0}', space=vmem, size = 0x80000, scoped, tag = 'output window, operand 0']
    #allocation3 [shape = 's32[2]{0}', space=sflag, size = 0x8, scoped, tag = 'scoped memory for tpu_custom_call.1']
    #allocation4 [shape = 'u8[524288]{0}', space=vmem, size = 0x80000, scoped, tag = 'output window, operand 1']
    #allocation5 [shape = 's32[2]{0}', space=sflag, size = 0x8, scoped, tag = 'scoped memory for tpu_custom_call.1']
    %16 = vsyncpa [#allocation3], 0
    %s17 = scalar_lea.sflag [#allocation3], 1
    %18 = vsyncpa %s17, 0
    %19 = vsyncpa [#allocation5], 0
    %s20 = scalar_lea.sflag [#allocation5], 1
    %21 = vsyncpa %s20, 0
    loop: start=0, step=1, limit=4
    $region2: #{tpu_custom_call.1} parent=1 // loop_pre_header
      _
    $region3: #{tpu_custom_call.1} parent=1 // loop_header
      %s23 = sphi 0, %s27
      %p24 = scmp.ge.s32.totalorder %s23, 4
      %s33 = sphi 0, %s35
      %s36 = sphi 0, %s33
      %s37 = sphi 0, %s36
      %s53 = sphi 0, %s37
      %s57 = sphi 0, %s57
      %s59 = sphi 0, %s57
      %s60 = sphi 0, %s59
      %s74 = sphi 0, %s60
      %s78 = sphi 0, %s78
      %s80 = sphi 0, %s78
      %s81 = sphi 0, %s80
      %s95 = sphi 0, %s81
      %s99 = sphi 0, %s99
      %s101 = sphi 0, %s99
      %s102 = sphi 0, %s101
      %s116 = sphi 0, %s102
      %s120 = sphi 0, %s120
      %s122 = sphi 0, %s120
      %s123 = sphi 0, %s122
      %s137 = sphi 0, %s123
      %s141 = sphi 0, %s141
      %s143 = sphi 0, %s141
      %s144 = sphi 0, %s143
      %s158 = sphi 0, %s144
      %s162 = sphi 0, %s162
      %s164 = sphi 0, %s162
      %s165 = sphi 0, %s164
      %s179 = sphi 0, %s165
      %s183 = sphi 0, %s183
      %s185 = sphi 0, %s183
      %s186 = sphi 0, %s185
      %s200 = sphi 0, %s186
      %s204 = sphi 0, %s204
      %s206 = sphi 0, %s204
      %s207 = sphi 0, %s206
      %s221 = sphi 0, %s207
      %s227 = sphi 0, %s229
      %s230 = sphi 0, %s227
      %s231 = sphi 0, %s230
      %s247 = sphi 0, %s231
      %s253 = sphi 0, %s255
      %s256 = sphi 0, %s253
      %s257 = sphi 0, %s256
      %s273 = sphi 0, %s257
    $region4: #{tpu_custom_call.1} parent=1 // loop_header_branch
      %26 = sbr.rel (%p24) target = $region8
    $region5: #{tpu_custom_call.1} parent=1 // loop_body
      %s28 = ssub.s32 %s23, 1
      %s29 = ssub.s32 %s23, 2
      %s30 = sadd.s32 %s23, 1
      %s31 = ssub.s32 %s23, %s30
      %p32 = scmp.eq.s32.totalorder %s31, 0
      %s34 = sadd.s32 %s33, 1
      %s35 = scalar_select %p32, %s33, %s34
      %p38 = pneg %p32
      %p39 = scmp.eq.s32.totalorder %s23, 1
      %p40 = por %p38, %p39
      %p41 = scmp.ne.s32.totalorder %s33, %s36
      %p42 = scmp.eq.s32.totalorder %s23, 0
      %p43 = por %p41, %p42
      %p44 = scmp.ne.s32.totalorder %s33, %s36
      %p45 = scmp.eq.s32.totalorder %s28, 1
      %p46 = por %p44, %p45
      %p47 = scmp.ne.s32.totalorder %s36, %s37
      %p48 = scmp.eq.s32.totalorder %s28, 0
      %p49 = por %p47, %p48
      %p50 = scmp.ne.s32.totalorder %s36, %s37
      %p51 = scmp.eq.s32.totalorder %s29, 1
      %p52 = por %p50, %p51
      %p54 = scmp.ne.s32.totalorder %s37, %s53
      %p55 = scmp.eq.s32.totalorder %s29, 0
      %p56 = por %p54, %p55
      %s58 = sadd.s32 %s57, 1
      %p61 = scmp.eq.s32.totalorder %s23, 1
      %p62 = scmp.ne.s32.totalorder %s57, %s59
      %p63 = scmp.eq.s32.totalorder %s23, 0
      %p64 = por %p62, %p63
      %p65 = scmp.ne.s32.totalorder %s57, %s59
      %p66 = scmp.eq.s32.totalorder %s28, 1
      %p67 = por %p65, %p66
      %p68 = scmp.ne.s32.totalorder %s59, %s60
      %p69 = scmp.eq.s32.totalorder %s28, 0
      %p70 = por %p68, %p69
      %p71 = scmp.ne.s32.totalorder %s59, %s60
      %p72 = scmp.eq.s32.totalorder %s29, 1
      %p73 = por %p71, %p72
      %p75 = scmp.ne.s32.totalorder %s60, %s74
      %p76 = scmp.eq.s32.totalorder %s29, 0
      %p77 = por %p75, %p76
      %s79 = sadd.s32 %s78, 1
      %p82 = scmp.eq.s32.totalorder %s23, 1
      %p83 = scmp.ne.s32.totalorder %s78, %s80
      %p84 = scmp.eq.s32.totalorder %s23, 0
      %p85 = por %p83, %p84
      %p86 = scmp.ne.s32.totalorder %s78, %s80
      %p87 = scmp.eq.s32.totalorder %s28, 1
      %p88 = por %p86, %p87
      %p89 = scmp.ne.s32.totalorder %s80, %s81
      %p90 = scmp.eq.s32.totalorder %s28, 0
      %p91 = por %p89, %p90
      %p92 = scmp.ne.s32.totalorder %s80, %s81
      %p93 = scmp.eq.s32.totalorder %s29, 1
      %p94 = por %p92, %p93
      %p96 = scmp.ne.s32.totalorder %s81, %s95
      %p97 = scmp.eq.s32.totalorder %s29, 0
      %p98 = por %p96, %p97
      %s100 = sadd.s32 %s99, 1
      %p103 = scmp.eq.s32.totalorder %s23, 1
      %p104 = scmp.ne.s32.totalorder %s99, %s101
      %p105 = scmp.eq.s32.totalorder %s23, 0
      %p106 = por %p104, %p105
      %p107 = scmp.ne.s32.totalorder %s99, %s101
      %p108 = scmp.eq.s32.totalorder %s28, 1
      %p109 = por %p107, %p108
      %p110 = scmp.ne.s32.totalorder %s101, %s102
      %p111 = scmp.eq.s32.totalorder %s28, 0
      %p112 = por %p110, %p111
      %p113 = scmp.ne.s32.totalorder %s101, %s102
      %p114 = scmp.eq.s32.totalorder %s29, 1
      %p115 = por %p113, %p114
      %p117 = scmp.ne.s32.totalorder %s102, %s116
      %p118 = scmp.eq.s32.totalorder %s29, 0
      %p119 = por %p117, %p118
      %s121 = sadd.s32 %s120, 1
      %p124 = scmp.eq.s32.totalorder %s23, 1
      %p125 = scmp.ne.s32.totalorder %s120, %s122
      %p126 = scmp.eq.s32.totalorder %s23, 0
      %p127 = por %p125, %p126
      %p128 = scmp.ne.s32.totalorder %s120, %s122
      %p129 = scmp.eq.s32.totalorder %s28, 1
      %p130 = por %p128, %p129
      %p131 = scmp.ne.s32.totalorder %s122, %s123
      %p132 = scmp.eq.s32.totalorder %s28, 0
      %p133 = por %p131, %p132
      %p134 = scmp.ne.s32.totalorder %s122, %s123
      %p135 = scmp.eq.s32.totalorder %s29, 1
      %p136 = por %p134, %p135
      %p138 = scmp.ne.s32.totalorder %s123, %s137
      %p139 = scmp.eq.s32.totalorder %s29, 0
      %p140 = por %p138, %p139
      %s142 = sadd.s32 %s141, 1
      %p145 = scmp.eq.s32.totalorder %s23, 1
      %p146 = scmp.ne.s32.totalorder %s141, %s143
      %p147 = scmp.eq.s32.totalorder %s23, 0
      %p148 = por %p146, %p147
      %p149 = scmp.ne.s32.totalorder %s141, %s143
      %p150 = scmp.eq.s32.totalorder %s28, 1
      %p151 = por %p149, %p150
      %p152 = scmp.ne.s32.totalorder %s143, %s144
      %p153 = scmp.eq.s32.totalorder %s28, 0
      %p154 = por %p152, %p153
      %p155 = scmp.ne.s32.totalorder %s143, %s144
      %p156 = scmp.eq.s32.totalorder %s29, 1
      %p157 = por %p155, %p156
      %p159 = scmp.ne.s32.totalorder %s144, %s158
      %p160 = scmp.eq.s32.totalorder %s29, 0
      %p161 = por %p159, %p160
      %s163 = sadd.s32 %s162, 1
      %p166 = scmp.eq.s32.totalorder %s23, 1
      %p167 = scmp.ne.s32.totalorder %s162, %s164
      %p168 = scmp.eq.s32.totalorder %s23, 0
      %p169 = por %p167, %p168
      %p170 = scmp.ne.s32.totalorder %s162, %s164
      %p171 = scmp.eq.s32.totalorder %s28, 1
      %p172 = por %p170, %p171
      %p173 = scmp.ne.s32.totalorder %s164, %s165
      %p174 = scmp.eq.s32.totalorder %s28, 0
      %p175 = por %p173, %p174
      %p176 = scmp.ne.s32.totalorder %s164, %s165
      %p177 = scmp.eq.s32.totalorder %s29, 1
      %p178 = por %p176, %p177
      %p180 = scmp.ne.s32.totalorder %s165, %s179
      %p181 = scmp.eq.s32.totalorder %s29, 0
      %p182 = por %p180, %p181
      %s184 = sadd.s32 %s183, 1
      %p187 = scmp.eq.s32.totalorder %s23, 1
      %p188 = scmp.ne.s32.totalorder %s183, %s185
      %p189 = scmp.eq.s32.totalorder %s23, 0
      %p190 = por %p188, %p189
      %p191 = scmp.ne.s32.totalorder %s183, %s185
      %p192 = scmp.eq.s32.totalorder %s28, 1
      %p193 = por %p191, %p192
      %p194 = scmp.ne.s32.totalorder %s185, %s186
      %p195 = scmp.eq.s32.totalorder %s28, 0
      %p196 = por %p194, %p195
      %p197 = scmp.ne.s32.totalorder %s185, %s186
      %p198 = scmp.eq.s32.totalorder %s29, 1
      %p199 = por %p197, %p198
      %p201 = scmp.ne.s32.totalorder %s186, %s200
      %p202 = scmp.eq.s32.totalorder %s29, 0
      %p203 = por %p201, %p202
      %s205 = sadd.s32 %s204, 1
      %p208 = scmp.eq.s32.totalorder %s23, 1
      %p209 = scmp.ne.s32.totalorder %s204, %s206
      %p210 = scmp.eq.s32.totalorder %s23, 0
      %p211 = por %p209, %p210
      %p212 = scmp.ne.s32.totalorder %s204, %s206
      %p213 = scmp.eq.s32.totalorder %s28, 1
      %p214 = por %p212, %p213
      %p215 = scmp.ne.s32.totalorder %s206, %s207
      %p216 = scmp.eq.s32.totalorder %s28, 0
      %p217 = por %p215, %p216
      %p218 = scmp.ne.s32.totalorder %s206, %s207
      %p219 = scmp.eq.s32.totalorder %s29, 1
      %p220 = por %p218, %p219
      %p222 = scmp.ne.s32.totalorder %s207, %s221
      %p223 = scmp.eq.s32.totalorder %s29, 0
      %p224 = por %p222, %p223
      %s225 = ssub.s32 %s23, %s30
      %p226 = scmp.eq.s32.totalorder %s225, 0
      %s228 = sadd.s32 %s227, 1
      %s229 = scalar_select %p226, %s227, %s228
      %p232 = pneg %p226
      %p233 = scmp.eq.s32.totalorder %s23, 1
      %p234 = por %p232, %p233
      %p235 = scmp.ne.s32.totalorder %s227, %s230
      %p236 = scmp.eq.s32.totalorder %s23, 0
      %p237 = por %p235, %p236
      %p238 = scmp.ne.s32.totalorder %s227, %s230
      %p239 = scmp.eq.s32.totalorder %s28, 1
      %p240 = por %p238, %p239
      %p241 = scmp.ne.s32.totalorder %s230, %s231
      %p242 = scmp.eq.s32.totalorder %s28, 0
      %p243 = por %p241, %p242
      %p244 = scmp.ne.s32.totalorder %s230, %s231
      %p245 = scmp.eq.s32.totalorder %s29, 1
      %p246 = por %p244, %p245
      %p248 = scmp.ne.s32.totalorder %s231, %s247
      %p249 = scmp.eq.s32.totalorder %s29, 0
      %p250 = por %p248, %p249
      %s251 = ssub.s32 %s23, %s30
      %p252 = scmp.eq.s32.totalorder %s251, 0
      %s254 = sadd.s32 %s253, 1
      %s255 = scalar_select %p252, %s253, %s254
      %p258 = pneg %p252
      %p259 = scmp.eq.s32.totalorder %s23, 1
      %p260 = por %p258, %p259
      %p261 = scmp.ne.s32.totalorder %s253, %s256
      %p262 = scmp.eq.s32.totalorder %s23, 0
      %p263 = por %p261, %p262
      %p264 = scmp.ne.s32.totalorder %s253, %s256
      %p265 = scmp.eq.s32.totalorder %s28, 1
      %p266 = por %p264, %p265
      %p267 = scmp.ne.s32.totalorder %s256, %s257
      %p268 = scmp.eq.s32.totalorder %s28, 0
      %p269 = por %p267, %p268
      %p270 = scmp.ne.s32.totalorder %s256, %s257
      %p271 = scmp.eq.s32.totalorder %s29, 1
      %p272 = por %p270, %p271
      %p274 = scmp.ne.s32.totalorder %s257, %s273
      %p275 = scmp.eq.s32.totalorder %s29, 0
      %p276 = por %p274, %p275
      %p277 = scmp.le.s32.totalorder 1, %s23
      %p278 = scmp.lt.s32.totalorder %s23, 3
      %p279 = pnand %p277, %p278
      %p280 = pneg %p279
      // Predicated region
      $region9: #{tpu_custom_call.1} parent=5 // pred_check
        _
      $region10: #{tpu_custom_call.1} parent=5 // pred_check_branch
        %282 = sbr.rel (%p279) target = $region12
      $region11: #{tpu_custom_call.1} parent=5 // pred_region
        %s283 = ssub.s32 %s23, 1
        // Predicated region
        $region13: #{tpu_custom_call.1} parent=11 // pred_check
          %p284 = pneg %p70
        $region14: #{tpu_custom_call.1} parent=11 // pred_check_branch
          %286 = sbr.rel (%p284) target = $region16
        $region15: #{tpu_custom_call.1} parent=11 // pred_region
          _
        $region16: #{tpu_custom_call.1} parent=11 // pred_fallthru
          _
        // Predicated region
        $region17: #{tpu_custom_call.1} parent=11 // pred_check
          %p287 = pneg %p91
        $region18: #{tpu_custom_call.1} parent=11 // pred_check_branch
          %289 = sbr.rel (%p287) target = $region20
        $region19: #{tpu_custom_call.1} parent=11 // pred_region
          _
        $region20: #{tpu_custom_call.1} parent=11 // pred_fallthru
          _
        // Predicated region
        $region21: #{tpu_custom_call.1} parent=11 // pred_check
          %p290 = pneg %p112
        $region22: #{tpu_custom_call.1} parent=11 // pred_check_branch
          %292 = sbr.rel (%p290) target = $region24
        $region23: #{tpu_custom_call.1} parent=11 // pred_region
          _
        $region24: #{tpu_custom_call.1} parent=11 // pred_fallthru
          _
        // Predicated region
        $region25: #{tpu_custom_call.1} parent=11 // pred_check
          %p293 = pneg %p133
        $region26: #{tpu_custom_call.1} parent=11 // pred_check_branch
          %295 = sbr.rel (%p293) target = $region28
        $region27: #{tpu_custom_call.1} parent=11 // pred_region
          _
        $region28: #{tpu_custom_call.1} parent=11 // pred_fallthru
          _
        // Predicated region
        $region29: #{tpu_custom_call.1} parent=11 // pred_check
          %p296 = pneg %p154
        $region30: #{tpu_custom_call.1} parent=11 // pred_check_branch
          %298 = sbr.rel (%p296) target = $region32
        $region31: #{tpu_custom_call.1} parent=11 // pred_region
          _
        $region32: #{tpu_custom_call.1} parent=11 // pred_fallthru
          _
        // Predicated region
        $region33: #{tpu_custom_call.1} parent=11 // pred_check
          %p299 = pneg %p175
        $region34: #{tpu_custom_call.1} parent=11 // pred_check_branch
          %301 = sbr.rel (%p299) target = $region36
        $region35: #{tpu_custom_call.1} parent=11 // pred_region
          _
        $region36: #{tpu_custom_call.1} parent=11 // pred_fallthru
          _
        // Predicated region
        $region37: #{tpu_custom_call.1} parent=11 // pred_check
          %p302 = pneg %p196
        $region38: #{tpu_custom_call.1} parent=11 // pred_check_branch
          %304 = sbr.rel (%p302) target = $region40
        $region39: #{tpu_custom_call.1} parent=11 // pred_region
          _
        $region40: #{tpu_custom_call.1} parent=11 // pred_fallthru
          _
        // Predicated region
        $region41: #{tpu_custom_call.1} parent=11 // pred_check
          %p305 = pneg %p217
        $region42: #{tpu_custom_call.1} parent=11 // pred_check_branch
          %307 = sbr.rel (%p305) target = $region44
        $region43: #{tpu_custom_call.1} parent=11 // pred_region
          _
        $region44: #{tpu_custom_call.1} parent=11 // pred_fallthru
          _
      $region12: #{tpu_custom_call.1} parent=5 // pred_fallthru
        _
      %p308 = scmp.lt.s32.totalorder %s23, 2
      // Predicated region
      $region45: #{tpu_custom_call.1} parent=5 // pred_check
        %p309 = pneg %p308
      $region46: #{tpu_custom_call.1} parent=5 // pred_check_branch
        %311 = sbr.rel (%p309) target = $region48
      $region47: #{tpu_custom_call.1} parent=5 // pred_region
        // Predicated region
        $region49: #{tpu_custom_call.1} parent=47 // pred_check
          %p312 = pneg %p43
        $region50: #{tpu_custom_call.1} parent=47 // pred_check_branch
          %314 = sbr.rel (%p312) target = $region52
        $region51: #{tpu_custom_call.1} parent=47 // pred_region
          %s315 = smul.u32 64, %s23
          %p316 = scmp.lt.s32.totalorder %s315, 127
          %s317 = scalar_select %p316, %s315, 127
          %s318 = smul.addr %s317, 4
          %s319 = scalar_lea.vmem %s0, %s318
          %s320 = smul.u32 64, %s23
        $region52: #{tpu_custom_call.1} parent=47 // pred_fallthru
          _
      $region48: #{tpu_custom_call.1} parent=5 // pred_fallthru
        _
      %p321 = scmp.le.s32.totalorder 1, %s23
      %p322 = scmp.lt.s32.totalorder %s23, 3
      %p323 = pnand %p321, %p322
      %p324 = pneg %p323
      // Predicated region
      $region53: #{tpu_custom_call.1} parent=5 // pred_check
        _
      $region54: #{tpu_custom_call.1} parent=5 // pred_check_branch
        %326 = sbr.rel (%p323) target = $region56
      $region55: #{tpu_custom_call.1} parent=5 // pred_region
        %s327 = ssub.s32 %s23, 1
        %s328 = smul.u32 64, %s28
        %p329 = scmp.lt.s32.totalorder %s328, 127
        %s330 = scalar_select %p329, %s328, 127
        %s331 = smul.addr %s330, 4
        %s332 = scalar_lea.vmem %s0, %s331
        %p333 = pneg %p49
        %p334 = pneg %p46
        %p335 = pneg %p70
        %p336 = pneg %p67
        %p337 = pneg %p91
        %p338 = pneg %p88
        %p339 = pneg %p112
        %p340 = pneg %p109
        %p341 = pneg %p133
        %p342 = pneg %p130
        %p343 = pneg %p154
        %p344 = pneg %p151
        %p345 = pneg %p175
        %p346 = pneg %p172
        %p347 = pneg %p196
        %p348 = pneg %p193
        %p349 = pneg %p217
        %p350 = pneg %p214
        %p351 = pneg %p243
        %p352 = pneg %p240
        %s353 = sand.u32 %s230, 1
        %s354 = scalar_lea.sflag [#allocation3], %s353
        %s355 = sand.u32 %s230, 1
        %s356 = smul.addr %s355, 512
        %s357 = scalar_lea.vmem [#allocation2], %s356
        %p358 = pneg %p269
        %p359 = pneg %p266
        %s360 = sand.u32 %s256, 1
        %s361 = scalar_lea.sflag [#allocation5], %s360
        %s362 = sand.u32 %s256, 1
        %s363 = smul.addr %s362, 512
        %s364 = scalar_lea.vmem [#allocation4], %s363
        %s365 = smul.u32 64, %s28
        %p366 = scmp.lt.s32.totalorder %s365, 127
        %s367 = scalar_select %p366, %s365, 127
        %s368 = smul.addr %s367, 4
        %s369 = scalar_lea.vmem %s0, %s368
        %s370 = smul.u32 64, %s28
        %s371 = smul.u32 64, %s28
        %s372 = smul.u32 64, %s28
        %v374 = vld [vmem:[%s369] sm:$0xf]
        %v375 = vld [vmem:[%s369 + $0x4] sm:$0xf]
        %v376 = vld [vmem:[%s369 + $0x8] sm:$0xf]
        %v377 = vld [vmem:[%s369 + $0xc] sm:$0xf]
        %v378 = vld [vmem:[%s369 + $0x10] sm:$0xf]
        %v379 = vld [vmem:[%s369 + $0x14] sm:$0xf]
        %v380 = vld [vmem:[%s369 + $0x18] sm:$0xf]
        %v381 = vld [vmem:[%s369 + $0x1c] sm:$0xf]
        %v382 = vld [vmem:[%s369 + $0x20] sm:$0xf]
        %v383 = vld [vmem:[%s369 + $0x24] sm:$0xf]
        %v384 = vld [vmem:[%s369 + $0x28] sm:$0xf]
        %v385 = vld [vmem:[%s369 + $0x2c] sm:$0xf]
        %v386 = vld [vmem:[%s369 + $0x30] sm:$0xf]
        %v387 = vld [vmem:[%s369 + $0x34] sm:$0xf]
        %v388 = vld [vmem:[%s369 + $0x38] sm:$0xf]
        %v389 = vld [vmem:[%s369 + $0x3c] sm:$0xf]
        %v390 = vld [vmem:[%s369 + $0x40] sm:$0xf]
        %v391 = vld [vmem:[%s369 + $0x44] sm:$0xf]
        %v392 = vld [vmem:[%s369 + $0x48] sm:$0xf]
        %v393 = vld [vmem:[%s369 + $0x4c] sm:$0xf]
        %v394 = vld [vmem:[%s369 + $0x50] sm:$0xf]
        %v395 = vld [vmem:[%s369 + $0x54] sm:$0xf]
        %v396 = vld [vmem:[%s369 + $0x58] sm:$0xf]
        %v397 = vld [vmem:[%s369 + $0x5c] sm:$0xf]
        %v398 = vld [vmem:[%s369 + $0x60] sm:$0xf]
        %v399 = vld [vmem:[%s369 + $0x64] sm:$0xf]
        %v400 = vld [vmem:[%s369 + $0x68] sm:$0xf]
        %v401 = vld [vmem:[%s369 + $0x6c] sm:$0xf]
        %v402 = vld [vmem:[%s369 + $0x70] sm:$0xf]
        %v403 = vld [vmem:[%s369 + $0x74] sm:$0xf]
        %v404 = vld [vmem:[%s369 + $0x78] sm:$0xf]
        %v405 = vld [vmem:[%s369 + $0x7c] sm:$0xf]
        %v406 = vld [vmem:[%s369 + $0x80] sm:$0xf]
        %v407 = vld [vmem:[%s369 + $0x84] sm:$0xf]
        %v408 = vld [vmem:[%s369 + $0x88] sm:$0xf]
        %v409 = vld [vmem:[%s369 + $0x8c] sm:$0xf]
        %v410 = vld [vmem:[%s369 + $0x90] sm:$0xf]
        %v411 = vld [vmem:[%s369 + $0x94] sm:$0xf]
        %v412 = vld [vmem:[%s369 + $0x98] sm:$0xf]
        %v413 = vld [vmem:[%s369 + $0x9c] sm:$0xf]
        %v414 = vld [vmem:[%s369 + $0xa0] sm:$0xf]
        %v415 = vld [vmem:[%s369 + $0xa4] sm:$0xf]
        %v416 = vld [vmem:[%s369 + $0xa8] sm:$0xf]
        %v417 = vld [vmem:[%s369 + $0xac] sm:$0xf]
        %v418 = vld [vmem:[%s369 + $0xb0] sm:$0xf]
        %v419 = vld [vmem:[%s369 + $0xb4] sm:$0xf]
        %v420 = vld [vmem:[%s369 + $0xb8] sm:$0xf]
        %v421 = vld [vmem:[%s369 + $0xbc] sm:$0xf]
        %v422 = vld [vmem:[%s369 + $0xc0] sm:$0xf]
        %v423 = vld [vmem:[%s369 + $0xc4] sm:$0xf]
        %v424 = vld [vmem:[%s369 + $0xc8] sm:$0xf]
        %v425 = vld [vmem:[%s369 + $0xcc] sm:$0xf]
        %v426 = vld [vmem:[%s369 + $0xd0] sm:$0xf]
        %v427 = vld [vmem:[%s369 + $0xd4] sm:$0xf]
        %v428 = vld [vmem:[%s369 + $0xd8] sm:$0xf]
        %v429 = vld [vmem:[%s369 + $0xdc] sm:$0xf]
        %v430 = vld [vmem:[%s369 + $0xe0] sm:$0xf]
        %v431 = vld [vmem:[%s369 + $0xe4] sm:$0xf]
        %v432 = vld [vmem:[%s369 + $0xe8] sm:$0xf]
        %v433 = vld [vmem:[%s369 + $0xec] sm:$0xf]
        %v434 = vld [vmem:[%s369 + $0xf0] sm:$0xf]
        %v435 = vld [vmem:[%s369 + $0xf4] sm:$0xf]
        %v436 = vld [vmem:[%s369 + $0xf8] sm:$0xf]
        %v437 = vld [vmem:[%s369 + $0xfc] sm:$0xf]
        %v438 = vld [vmem:[%s1] sm:$0xf]
        %v439 = vld [vmem:[%s1 + $0x4] sm:$0xf]
        %v440 = vld [vmem:[%s1 + $0x8] sm:$0xf]
        %v441 = vld [vmem:[%s1 + $0xc] sm:$0xf]
        %v442 = vld [vmem:[%s2] sm:$0x1]
        %v444 = vlaneseq
        %v445 = vshrl.u32 %v444, 7
        %v446 = vsub.s32 0, %v445
        %v447 = vrot.slane %v442, %v446
        %v513 = vunpack.c.l.b16 %v374
        %v514 = vunpack.c.l.b16 %v375
        %v515 = vunpack.c.l.b16 %v376
        %v516 = vunpack.c.l.b16 %v377
        %v517 = vunpack.c.l.b16 %v378
        %v518 = vunpack.c.l.b16 %v379
        %v519 = vunpack.c.l.b16 %v380
        %v520 = vunpack.c.l.b16 %v381
        %v521 = vunpack.c.l.b16 %v382
        %v522 = vunpack.c.l.b16 %v383
        %v523 = vunpack.c.l.b16 %v384
        %v524 = vunpack.c.l.b16 %v385
        %v525 = vunpack.c.l.b16 %v386
        %v526 = vunpack.c.l.b16 %v387
        %v527 = vunpack.c.l.b16 %v388
        %v528 = vunpack.c.l.b16 %v389
        %v529 = vunpack.c.l.b16 %v390
        %v530 = vunpack.c.l.b16 %v391
        %v531 = vunpack.c.l.b16 %v392
        %v532 = vunpack.c.l.b16 %v393
        %v533 = vunpack.c.l.b16 %v394
        %v534 = vunpack.c.l.b16 %v395
        %v535 = vunpack.c.l.b16 %v396
        %v536 = vunpack.c.l.b16 %v397
        %v537 = vunpack.c.l.b16 %v398
        %v538 = vunpack.c.l.b16 %v399
        %v539 = vunpack.c.l.b16 %v400
        %v540 = vunpack.c.l.b16 %v401
        %v541 = vunpack.c.l.b16 %v402
        %v542 = vunpack.c.l.b16 %v403
        %v543 = vunpack.c.l.b16 %v404
        %v544 = vunpack.c.l.b16 %v405
        %v545 = vunpack.c.l.b16 %v406
        %v546 = vunpack.c.l.b16 %v407
        %v547 = vunpack.c.l.b16 %v408
        %v548 = vunpack.c.l.b16 %v409
        %v549 = vunpack.c.l.b16 %v410
        %v550 = vunpack.c.l.b16 %v411
        %v551 = vunpack.c.l.b16 %v412
        %v552 = vunpack.c.l.b16 %v413
        %v553 = vunpack.c.l.b16 %v414
        %v554 = vunpack.c.l.b16 %v415
        %v555 = vunpack.c.l.b16 %v416
        %v556 = vunpack.c.l.b16 %v417
        %v557 = vunpack.c.l.b16 %v418
        %v558 = vunpack.c.l.b16 %v419
        %v559 = vunpack.c.l.b16 %v420
        %v560 = vunpack.c.l.b16 %v421
        %v561 = vunpack.c.l.b16 %v422
        %v562 = vunpack.c.l.b16 %v423
        %v563 = vunpack.c.l.b16 %v424
        %v564 = vunpack.c.l.b16 %v425
        %v565 = vunpack.c.l.b16 %v426
        %v566 = vunpack.c.l.b16 %v427
        %v567 = vunpack.c.l.b16 %v428
        %v568 = vunpack.c.l.b16 %v429
        %v569 = vunpack.c.l.b16 %v430
        %v570 = vunpack.c.l.b16 %v431
        %v571 = vunpack.c.l.b16 %v432
        %v572 = vunpack.c.l.b16 %v433
        %v573 = vunpack.c.l.b16 %v434
        %v574 = vunpack.c.l.b16 %v435
        %v575 = vunpack.c.l.b16 %v436
        %v576 = vunpack.c.l.b16 %v437
        %v577 = vpack.c.b16 %v514, %v513
        %v578 = vpack.c.b16 %v516, %v515
        %v579 = vpack.c.b16 %v518, %v517
        %v580 = vpack.c.b16 %v520, %v519
        %v581 = vpack.c.b16 %v522, %v521
        %v582 = vpack.c.b16 %v524, %v523
        %v583 = vpack.c.b16 %v526, %v525
        %v584 = vpack.c.b16 %v528, %v527
        %v585 = vpack.c.b16 %v530, %v529
        %v586 = vpack.c.b16 %v532, %v531
        %v587 = vpack.c.b16 %v534, %v533
        %v588 = vpack.c.b16 %v536, %v535
        %v589 = vpack.c.b16 %v538, %v537
        %v590 = vpack.c.b16 %v540, %v539
        %v591 = vpack.c.b16 %v542, %v541
        %v592 = vpack.c.b16 %v544, %v543
        %v593 = vpack.c.b16 %v546, %v545
        %v594 = vpack.c.b16 %v548, %v547
        %v595 = vpack.c.b16 %v550, %v549
        %v596 = vpack.c.b16 %v552, %v551
        %v597 = vpack.c.b16 %v554, %v553
        %v598 = vpack.c.b16 %v556, %v555
        %v599 = vpack.c.b16 %v558, %v557
        %v600 = vpack.c.b16 %v560, %v559
        %v601 = vpack.c.b16 %v562, %v561
        %v602 = vpack.c.b16 %v564, %v563
        %v603 = vpack.c.b16 %v566, %v565
        %v604 = vpack.c.b16 %v568, %v567
        %v605 = vpack.c.b16 %v570, %v569
        %v606 = vpack.c.b16 %v572, %v571
        %v607 = vpack.c.b16 %v574, %v573
        %v608 = vpack.c.b16 %v576, %v575
        %v613 = vunpack.c.l.b16 %v438
        %v614 = vunpack.c.l.b16 %v439
        %v615 = vunpack.c.l.b16 %v440
        %v616 = vunpack.c.l.b16 %v441
        %v617 = vpack.c.b16 %v614, %v613
        %v618 = vpack.c.b16 %v616, %v615
        %vm621 = vcmask 261120
        %v623 = vsel %vm621, %v577, 0
        %v626 = vsel %vm621, %v578, 0
        %v629 = vsel %vm621, %v579, 0
        %v632 = vsel %vm621, %v580, 0
        %v635 = vsel %vm621, %v581, 0
        %v638 = vsel %vm621, %v582, 0
        %v641 = vsel %vm621, %v583, 0
        %v644 = vsel %vm621, %v584, 0
        %v647 = vsel %vm621, %v585, 0
        %v650 = vsel %vm621, %v586, 0
        %v653 = vsel %vm621, %v587, 0
        %v656 = vsel %vm621, %v588, 0
        %v659 = vsel %vm621, %v589, 0
        %v662 = vsel %vm621, %v590, 0
        %v665 = vsel %vm621, %v591, 0
        %v668 = vsel %vm621, %v592, 0
        %v671 = vsel %vm621, %v593, 0
        %v674 = vsel %vm621, %v594, 0
        %v677 = vsel %vm621, %v595, 0
        %v680 = vsel %vm621, %v596, 0
        %v683 = vsel %vm621, %v597, 0
        %v686 = vsel %vm621, %v598, 0
        %v689 = vsel %vm621, %v599, 0
        %v692 = vsel %vm621, %v600, 0
        %v695 = vsel %vm621, %v601, 0
        %v698 = vsel %vm621, %v602, 0
        %v701 = vsel %vm621, %v603, 0
        %v704 = vsel %vm621, %v604, 0
        %v707 = vsel %vm621, %v605, 0
        %v710 = vsel %vm621, %v606, 0
        %v713 = vsel %vm621, %v607, 0
        %v716 = vsel %vm621, %v608, 0
        %718 = vmatprep.subr.bf16.mxu0 0
        %719 = vmatpush1.bf16.msra.mxu0 %v617
        %720 = vmatprep.subr.bf16.mxu0 0
        %721 = vmatpush1.bf16.msra.mxu0 %v618
        %722 = vmatprep.subr.bf16.mxu0 0
        %723 = vmatpush1.bf16.msra.mxu0 0
        %724 = vmatprep.subr.bf16.mxu0 0
        %725 = vmatpush1.bf16.msra.mxu0 0
        %726 = vmatprep.subr.bf16.mxu0 0
        %727 = vmatpush1.bf16.msra.mxu0 0
        %728 = vmatprep.subr.bf16.mxu0 0
        %729 = vmatpush1.bf16.msra.mxu0 0
        %730 = vmatprep.subr.bf16.mxu0 0
        %731 = vmatpush1.bf16.msra.mxu0 0
        %732 = vmatprep.subr.bf16.mxu0 0
        %733 = vmatpush1.bf16.msra.mxu0 0
        %734 = vmatprep.subr.bf16.mxu0 0
        %735 = vmatpush1.bf16.msra.mxu0 0
        %736 = vmatprep.subr.bf16.mxu0 0
        %737 = vmatpush1.bf16.msra.mxu0 0
        %738 = vmatprep.subr.bf16.mxu0 0
        %739 = vmatpush1.bf16.msra.mxu0 0
        %740 = vmatprep.subr.bf16.mxu0 0
        %741 = vmatpush1.bf16.msra.mxu0 0
        %742 = vmatprep.subr.bf16.mxu0 0
        %743 = vmatpush1.bf16.msra.mxu0 0
        %744 = vmatprep.subr.bf16.mxu0 0
        %745 = vmatpush1.bf16.msra.mxu0 0
        %746 = vmatprep.subr.bf16.mxu0 0
        %747 = vmatpush1.bf16.msra.mxu0 0
        %748 = vmatprep.subr.bf16.mxu0 0
        %749 = vmatpush1.bf16.msra.mxu0 0
        %750 = vmatprep.mubr.bf16.mxu0 0
        %751 = vmatmul.mubr.bf16.gmra.mrb[0].mxu0 %v623
        %v752 = vpop.f32.mrb[0].mxu0
        %v753 = vadd.f32 %v447, %v752
        %v754 = vpop.f32.mrb[0].mxu0
        %v755 = vpop.f32.mrb[0].mxu0
        %v756 = vadd.f32 %v447, %v755
        %v757 = vpop.f32.mrb[0].mxu0
        %758 = vmatprep.mubr.bf16.mxu0 0
        %759 = vmatmul.mubr.bf16.gmra.mrb[0].mxu0 %v626
        %v760 = vpop.f32.mrb[0].mxu0
        %v761 = vadd.f32 %v447, %v760
        %v762 = vpop.f32.mrb[0].mxu0
        %v763 = vpop.f32.mrb[0].mxu0
        %v764 = vadd.f32 %v447, %v763
        %v765 = vpop.f32.mrb[0].mxu0
        %766 = vmatprep.mubr.bf16.mxu0 0
        %767 = vmatmul.mubr.bf16.gmra.mrb[0].mxu0 %v629
        %v768 = vpop.f32.mrb[0].mxu0
        %v769 = vadd.f32 %v447, %v768
        %v770 = vpop.f32.mrb[0].mxu0
        %v771 = vpop.f32.mrb[0].mxu0
        %v772 = vadd.f32 %v447, %v771
        %v773 = vpop.f32.mrb[0].mxu0
        %774 = vmatprep.mubr.bf16.mxu0 0
        %775 = vmatmul.mubr.bf16.gmra.mrb[0].mxu0 %v632
        %v776 = vpop.f32.mrb[0].mxu0
        %v777 = vadd.f32 %v447, %v776
        %v778 = vpop.f32.mrb[0].mxu0
        %v779 = vpop.f32.mrb[0].mxu0
        %v780 = vadd.f32 %v447, %v779
        %v781 = vpop.f32.mrb[0].mxu0
        %782 = vmatprep.mubr.bf16.mxu0 0
        %783 = vmatmul.mubr.bf16.gmra.mrb[0].mxu0 %v635
        %v784 = vpop.f32.mrb[0].mxu0
        %v785 = vadd.f32 %v447, %v784
        %v786 = vpop.f32.mrb[0].mxu0
        %v787 = vpop.f32.mrb[0].mxu0
        %v788 = vadd.f32 %v447, %v787
        %v789 = vpop.f32.mrb[0].mxu0
        %790 = vmatprep.mubr.bf16.mxu0 0
        %791 = vmatmul.mubr.bf16.gmra.mrb[0].mxu0 %v638
        %v792 = vpop.f32.mrb[0].mxu0
        %v793 = vadd.f32 %v447, %v792
        %v794 = vpop.f32.mrb[0].mxu0
        %v795 = vpop.f32.mrb[0].mxu0
        %v796 = vadd.f32 %v447, %v795
        %v797 = vpop.f32.mrb[0].mxu0
        %798 = vmatprep.mubr.bf16.mxu0 0
        %799 = vmatmul.mubr.bf16.gmra.mrb[0].mxu0 %v641
        %v800 = vpop.f32.mrb[0].mxu0
        %v801 = vadd.f32 %v447, %v800
        %v802 = vpop.f32.mrb[0].mxu0
        %v803 = vpop.f32.mrb[0].mxu0
        %v804 = vadd.f32 %v447, %v803
        %v805 = vpop.f32.mrb[0].mxu0
        %806 = vmatprep.mubr.bf16.mxu0 0
        %807 = vmatmul.mubr.bf16.gmra.mrb[0].mxu0 %v644
        %v808 = vpop.f32.mrb[0].mxu0
        %v809 = vadd.f32 %v447, %v808
        %v810 = vpop.f32.mrb[0].mxu0
        %v811 = vpop.f32.mrb[0].mxu0
        %v812 = vadd.f32 %v447, %v811
        %v813 = vpop.f32.mrb[0].mxu0
        %814 = vmatprep.mubr.bf16.mxu0 0
        %815 = vmatmul.mubr.bf16.gmra.mrb[0].mxu0 %v647
        %v816 = vpop.f32.mrb[0].mxu0
        %v817 = vadd.f32 %v447, %v816
        %v818 = vpop.f32.mrb[0].mxu0
        %v819 = vpop.f32.mrb[0].mxu0
        %v820 = vadd.f32 %v447, %v819
        %v821 = vpop.f32.mrb[0].mxu0
        %822 = vmatprep.mubr.bf16.mxu0 0
        %823 = vmatmul.mubr.bf16.gmra.mrb[0].mxu0 %v650
        %v824 = vpop.f32.mrb[0].mxu0
        %v825 = vadd.f32 %v447, %v824
        %v826 = vpop.f32.mrb[0].mxu0
        %v827 = vpop.f32.mrb[0].mxu0
        %v828 = vadd.f32 %v447, %v827
        %v829 = vpop.f32.mrb[0].mxu0
        %830 = vmatprep.mubr.bf16.mxu0 0
        %831 = vmatmul.mubr.bf16.gmra.mrb[0].mxu0 %v653
        %v832 = vpop.f32.mrb[0].mxu0
        %v833 = vadd.f32 %v447, %v832
        %v834 = vpop.f32.mrb[0].mxu0
        %v835 = vpop.f32.mrb[0].mxu0
        %v836 = vadd.f32 %v447, %v835
        %v837 = vpop.f32.mrb[0].mxu0
        %838 = vmatprep.mubr.bf16.mxu0 0
        %839 = vmatmul.mubr.bf16.gmra.mrb[0].mxu0 %v656
        %v840 = vpop.f32.mrb[0].mxu0
        %v841 = vadd.f32 %v447, %v840
        %v842 = vpop.f32.mrb[0].mxu0
        %v843 = vpop.f32.mrb[0].mxu0
        %v844 = vadd.f32 %v447, %v843
        %v845 = vpop.f32.mrb[0].mxu0
        %846 = vmatprep.mubr.bf16.mxu0 0
        %847 = vmatmul.mubr.bf16.gmra.mrb[0].mxu0 %v659
        %v848 = vpop.f32.mrb[0].mxu0
        %v849 = vadd.f32 %v447, %v848
        %v850 = vpop.f32.mrb[0].mxu0
        %v851 = vpop.f32.mrb[0].mxu0
        %v852 = vadd.f32 %v447, %v851
        %v853 = vpop.f32.mrb[0].mxu0
        %854 = vmatprep.mubr.bf16.mxu0 0
        %855 = vmatmul.mubr.bf16.gmra.mrb[0].mxu0 %v662
        %v856 = vpop.f32.mrb[0].mxu0
        %v857 = vadd.f32 %v447, %v856
        %v858 = vpop.f32.mrb[0].mxu0
        %v859 = vpop.f32.mrb[0].mxu0
        %v860 = vadd.f32 %v447, %v859
        %v861 = vpop.f32.mrb[0].mxu0
        %862 = vmatprep.mubr.bf16.mxu0 0
        %863 = vmatmul.mubr.bf16.gmra.mrb[0].mxu0 %v665
        %v864 = vpop.f32.mrb[0].mxu0
        %v865 = vadd.f32 %v447, %v864
        %v866 = vpop.f32.mrb[0].mxu0
        %v867 = vpop.f32.mrb[0].mxu0
        %v868 = vadd.f32 %v447, %v867
        %v869 = vpop.f32.mrb[0].mxu0
        %870 = vmatprep.mubr.bf16.mxu0 0
        %871 = vmatmul.mubr.bf16.gmra.mrb[0].mxu0 %v668
        %v872 = vpop.f32.mrb[0].mxu0
        %v873 = vadd.f32 %v447, %v872
        %v874 = vpop.f32.mrb[0].mxu0
        %v875 = vpop.f32.mrb[0].mxu0
        %v876 = vadd.f32 %v447, %v875
        %v877 = vpop.f32.mrb[0].mxu0
        %878 = vmatprep.mubr.bf16.mxu0 0
        %879 = vmatmul.mubr.bf16.gmra.mrb[0].mxu0 %v671
        %v880 = vpop.f32.mrb[0].mxu0
        %v881 = vadd.f32 %v447, %v880
        %v882 = vpop.f32.mrb[0].mxu0
        %v883 = vpop.f32.mrb[0].mxu0
        %v884 = vadd.f32 %v447, %v883
        %v885 = vpop.f32.mrb[0].mxu0
        %886 = vmatprep.mubr.bf16.mxu0 0
        %887 = vmatmul.mubr.bf16.gmra.mrb[0].mxu0 %v674
        %v888 = vpop.f32.mrb[0].mxu0
        %v889 = vadd.f32 %v447, %v888
        %v890 = vpop.f32.mrb[0].mxu0
        %v891 = vpop.f32.mrb[0].mxu0
        %v892 = vadd.f32 %v447, %v891
        %v893 = vpop.f32.mrb[0].mxu0
        %894 = vmatprep.mubr.bf16.mxu0 0
        %895 = vmatmul.mubr.bf16.gmra.mrb[0].mxu0 %v677
        %v896 = vpop.f32.mrb[0].mxu0
        %v897 = vadd.f32 %v447, %v896
        %v898 = vpop.f32.mrb[0].mxu0
        %v899 = vpop.f32.mrb[0].mxu0
        %v900 = vadd.f32 %v447, %v899
        %v901 = vpop.f32.mrb[0].mxu0
        %902 = vmatprep.mubr.bf16.mxu0 0
        %903 = vmatmul.mubr.bf16.gmra.mrb[0].mxu0 %v680
        %v904 = vpop.f32.mrb[0].mxu0
        %v905 = vadd.f32 %v447, %v904
        %v906 = vpop.f32.mrb[0].mxu0
        %v907 = vpop.f32.mrb[0].mxu0
        %v908 = vadd.f32 %v447, %v907
        %v909 = vpop.f32.mrb[0].mxu0
        %910 = vmatprep.mubr.bf16.mxu0 0
        %911 = vmatmul.mubr.bf16.gmra.mrb[0].mxu0 %v683
        %v912 = vpop.f32.mrb[0].mxu0
        %v913 = vadd.f32 %v447, %v912
        %v914 = vpop.f32.mrb[0].mxu0
        %v915 = vpop.f32.mrb[0].mxu0
        %v916 = vadd.f32 %v447, %v915
        %v917 = vpop.f32.mrb[0].mxu0
        %918 = vmatprep.mubr.bf16.mxu0 0
        %919 = vmatmul.mubr.bf16.gmra.mrb[0].mxu0 %v686
        %v920 = vpop.f32.mrb[0].mxu0
        %v921 = vadd.f32 %v447, %v920
        %v922 = vpop.f32.mrb[0].mxu0
        %v923 = vpop.f32.mrb[0].mxu0
        %v924 = vadd.f32 %v447, %v923
        %v925 = vpop.f32.mrb[0].mxu0
        %926 = vmatprep.mubr.bf16.mxu0 0
        %927 = vmatmul.mubr.bf16.gmra.mrb[0].mxu0 %v689
        %v928 = vpop.f32.mrb[0].mxu0
        %v929 = vadd.f32 %v447, %v928
        %v930 = vpop.f32.mrb[0].mxu0
        %v931 = vpop.f32.mrb[0].mxu0
        %v932 = vadd.f32 %v447, %v931
        %v933 = vpop.f32.mrb[0].mxu0
        %934 = vmatprep.mubr.bf16.mxu0 0
        %935 = vmatmul.mubr.bf16.gmra.mrb[0].mxu0 %v692
        %v936 = vpop.f32.mrb[0].mxu0
        %v937 = vadd.f32 %v447, %v936
        %v938 = vpop.f32.mrb[0].mxu0
        %v939 = vpop.f32.mrb[0].mxu0
        %v940 = vadd.f32 %v447, %v939
        %v941 = vpop.f32.mrb[0].mxu0
        %942 = vmatprep.mubr.bf16.mxu0 0
        %943 = vmatmul.mubr.bf16.gmra.mrb[0].mxu0 %v695
        %v944 = vpop.f32.mrb[0].mxu0
        %v945 = vadd.f32 %v447, %v944
        %v946 = vpop.f32.mrb[0].mxu0
        %v947 = vpop.f32.mrb[0].mxu0
        %v948 = vadd.f32 %v447, %v947
        %v949 = vpop.f32.mrb[0].mxu0
        %950 = vmatprep.mubr.bf16.mxu0 0
        %951 = vmatmul.mubr.bf16.gmra.mrb[0].mxu0 %v698
        %v952 = vpop.f32.mrb[0].mxu0
        %v953 = vadd.f32 %v447, %v952
        %v954 = vpop.f32.mrb[0].mxu0
        %v955 = vpop.f32.mrb[0].mxu0
        %v956 = vadd.f32 %v447, %v955
        %v957 = vpop.f32.mrb[0].mxu0
        %958 = vmatprep.mubr.bf16.mxu0 0
        %959 = vmatmul.mubr.bf16.gmra.mrb[0].mxu0 %v701
        %v960 = vpop.f32.mrb[0].mxu0
        %v961 = vadd.f32 %v447, %v960
        %v962 = vpop.f32.mrb[0].mxu0
        %v963 = vpop.f32.mrb[0].mxu0
        %v964 = vadd.f32 %v447, %v963
        %v965 = vpop.f32.mrb[0].mxu0
        %966 = vmatprep.mubr.bf16.mxu0 0
        %967 = vmatmul.mubr.bf16.gmra.mrb[0].mxu0 %v704
        %v968 = vpop.f32.mrb[0].mxu0
        %v969 = vadd.f32 %v447, %v968
        %v970 = vpop.f32.mrb[0].mxu0
        %v971 = vpop.f32.mrb[0].mxu0
        %v972 = vadd.f32 %v447, %v971
        %v973 = vpop.f32.mrb[0].mxu0
        %974 = vmatprep.mubr.bf16.mxu0 0
        %975 = vmatmul.mubr.bf16.gmra.mrb[0].mxu0 %v707
        %v976 = vpop.f32.mrb[0].mxu0
        %v977 = vadd.f32 %v447, %v976
        %v978 = vpop.f32.mrb[0].mxu0
        %v979 = vpop.f32.mrb[0].mxu0
        %v980 = vadd.f32 %v447, %v979
        %v981 = vpop.f32.mrb[0].mxu0
        %982 = vmatprep.mubr.bf16.mxu0 0
        %983 = vmatmul.mubr.bf16.gmra.mrb[0].mxu0 %v710
        %v984 = vpop.f32.mrb[0].mxu0
        %v985 = vadd.f32 %v447, %v984
        %v986 = vpop.f32.mrb[0].mxu0
        %v987 = vpop.f32.mrb[0].mxu0
        %v988 = vadd.f32 %v447, %v987
        %v989 = vpop.f32.mrb[0].mxu0
        %990 = vmatprep.mubr.bf16.mxu0 0
        %991 = vmatmul.mubr.bf16.gmra.mrb[0].mxu0 %v713
        %v992 = vpop.f32.mrb[0].mxu0
        %v993 = vadd.f32 %v447, %v992
        %v994 = vpop.f32.mrb[0].mxu0
        %v995 = vpop.f32.mrb[0].mxu0
        %v996 = vadd.f32 %v447, %v995
        %v997 = vpop.f32.mrb[0].mxu0
        %998 = vmatprep.mubr.bf16.mxu0 0
        %999 = vmatmul.mubr.bf16.gmra.mrb[0].mxu0 %v716
        %v1000 = vpop.f32.mrb[0].mxu0
        %v1001 = vadd.f32 %v447, %v1000
        %v1002 = vpop.f32.mrb[0].mxu0
        %v1003 = vpop.f32.mrb[0].mxu0
        %v1004 = vadd.f32 %v447, %v1003
        %v1005 = vpop.f32.mrb[0].mxu0
        %1006 = vdwg.mxu0
        %v1007 = vmax.f32 %v753, 0.0
        %v1008 = vmax.f32 %v756, 0.0
        %v1009 = vmax.f32 %v761, 0.0
        %v1010 = vmax.f32 %v764, 0.0
        %v1011 = vmax.f32 %v769, 0.0
        %v1012 = vmax.f32 %v772, 0.0
        %v1013 = vmax.f32 %v777, 0.0
        %v1014 = vmax.f32 %v780, 0.0
        %v1015 = vmax.f32 %v785, 0.0
        %v1016 = vmax.f32 %v788, 0.0
        %v1017 = vmax.f32 %v793, 0.0
        %v1018 = vmax.f32 %v796, 0.0
        %v1019 = vmax.f32 %v801, 0.0
        %v1020 = vmax.f32 %v804, 0.0
        %v1021 = vmax.f32 %v809, 0.0
        %v1022 = vmax.f32 %v812, 0.0
        %v1023 = vmax.f32 %v817, 0.0
        %v1024 = vmax.f32 %v820, 0.0
        %v1025 = vmax.f32 %v825, 0.0
        %v1026 = vmax.f32 %v828, 0.0
        %v1027 = vmax.f32 %v833, 0.0
        %v1028 = vmax.f32 %v836, 0.0
        %v1029 = vmax.f32 %v841, 0.0
        %v1030 = vmax.f32 %v844, 0.0
        %v1031 = vmax.f32 %v849, 0.0
        %v1032 = vmax.f32 %v852, 0.0
        %v1033 = vmax.f32 %v857, 0.0
        %v1034 = vmax.f32 %v860, 0.0
        %v1035 = vmax.f32 %v865, 0.0
        %v1036 = vmax.f32 %v868, 0.0
        %v1037 = vmax.f32 %v873, 0.0
        %v1038 = vmax.f32 %v876, 0.0
        %v1039 = vmax.f32 %v881, 0.0
        %v1040 = vmax.f32 %v884, 0.0
        %v1041 = vmax.f32 %v889, 0.0
        %v1042 = vmax.f32 %v892, 0.0
        %v1043 = vmax.f32 %v897, 0.0
        %v1044 = vmax.f32 %v900, 0.0
        %v1045 = vmax.f32 %v905, 0.0
        %v1046 = vmax.f32 %v908, 0.0
        %v1047 = vmax.f32 %v913, 0.0
        %v1048 = vmax.f32 %v916, 0.0
        %v1049 = vmax.f32 %v921, 0.0
        %v1050 = vmax.f32 %v924, 0.0
        %v1051 = vmax.f32 %v929, 0.0
        %v1052 = vmax.f32 %v932, 0.0
        %v1053 = vmax.f32 %v937, 0.0
        %v1054 = vmax.f32 %v940, 0.0
        %v1055 = vmax.f32 %v945, 0.0
        %v1056 = vmax.f32 %v948, 0.0
        %v1057 = vmax.f32 %v953, 0.0
        %v1058 = vmax.f32 %v956, 0.0
        %v1059 = vmax.f32 %v961, 0.0
        %v1060 = vmax.f32 %v964, 0.0
        %v1061 = vmax.f32 %v969, 0.0
        %v1062 = vmax.f32 %v972, 0.0
        %v1063 = vmax.f32 %v977, 0.0
        %v1064 = vmax.f32 %v980, 0.0
        %v1065 = vmax.f32 %v985, 0.0
        %v1066 = vmax.f32 %v988, 0.0
        %v1067 = vmax.f32 %v993, 0.0
        %v1068 = vmax.f32 %v996, 0.0
        %v1069 = vmax.f32 %v1001, 0.0
        %v1070 = vmax.f32 %v1004, 0.0
        %v1071 = vpack.c.bf16 %v1008, %v1007
        %v1072 = vpack.c.bf16 %v1010, %v1009
        %v1073 = vpack.c.bf16 %v1012, %v1011
        %v1074 = vpack.c.bf16 %v1014, %v1013
        %v1075 = vpack.c.bf16 %v1016, %v1015
        %v1076 = vpack.c.bf16 %v1018, %v1017
        %v1077 = vpack.c.bf16 %v1020, %v1019
        %v1078 = vpack.c.bf16 %v1022, %v1021
        %v1079 = vpack.c.bf16 %v1024, %v1023
        %v1080 = vpack.c.bf16 %v1026, %v1025
        %v1081 = vpack.c.bf16 %v1028, %v1027
        %v1082 = vpack.c.bf16 %v1030, %v1029
        %v1083 = vpack.c.bf16 %v1032, %v1031
        %v1084 = vpack.c.bf16 %v1034, %v1033
        %v1085 = vpack.c.bf16 %v1036, %v1035
        %v1086 = vpack.c.bf16 %v1038, %v1037
        %v1087 = vpack.c.bf16 %v1040, %v1039
        %v1088 = vpack.c.bf16 %v1042, %v1041
        %v1089 = vpack.c.bf16 %v1044, %v1043
        %v1090 = vpack.c.bf16 %v1046, %v1045
        %v1091 = vpack.c.bf16 %v1048, %v1047
        %v1092 = vpack.c.bf16 %v1050, %v1049
        %v1093 = vpack.c.bf16 %v1052, %v1051
        %v1094 = vpack.c.bf16 %v1054, %v1053
        %v1095 = vpack.c.bf16 %v1056, %v1055
        %v1096 = vpack.c.bf16 %v1058, %v1057
        %v1097 = vpack.c.bf16 %v1060, %v1059
        %v1098 = vpack.c.bf16 %v1062, %v1061
        %v1099 = vpack.c.bf16 %v1064, %v1063
        %v1100 = vpack.c.bf16 %v1066, %v1065
        %v1101 = vpack.c.bf16 %v1068, %v1067
        %v1102 = vpack.c.bf16 %v1070, %v1069
        %v1103 = vld [vmem:[%s3] sm:$0xf]
        %v1104 = vld [vmem:[%s3 + $0x4] sm:$0xf]
        %v1105 = vld [vmem:[%s3 + $0x8] sm:$0xf]
        %v1106 = vld [vmem:[%s3 + $0xc] sm:$0xf]
        %v1107 = vld [vmem:[%s3 + $0x10] sm:$0xf]
        %v1108 = vld [vmem:[%s3 + $0x14] sm:$0xf]
        %v1109 = vld [vmem:[%s3 + $0x18] sm:$0xf]
        %v1110 = vld [vmem:[%s3 + $0x1c] sm:$0xf]
        %v1111 = vld [vmem:[%s4] sm:$0x1]
        %v1113 = vlaneseq
        %v1114 = vshrl.u32 %v1113, 7
        %v1115 = vsub.s32 0, %v1114
        %v1116 = vrot.slane %v1111, %v1115
        %v1126 = vunpack.c.l.b16 %v1103
        %v1127 = vunpack.c.l.b16 %v1104
        %v1128 = vunpack.c.l.b16 %v1105
        %v1129 = vunpack.c.l.b16 %v1106
        %v1130 = vunpack.c.l.b16 %v1107
        %v1131 = vunpack.c.l.b16 %v1108
        %v1132 = vunpack.c.l.b16 %v1109
        %v1133 = vunpack.c.l.b16 %v1110
        %v1134 = vpack.c.b16 %v1127, %v1126
        %v1135 = vpack.c.b16 %v1129, %v1128
        %v1136 = vpack.c.b16 %v1131, %v1130
        %v1137 = vpack.c.b16 %v1133, %v1132
        %vm1142 = vcmask 523264
        %v1144 = vsel %vm1142, %v1071, 0
        %v1147 = vsel %vm1142, %v1072, 0
        %v1150 = vsel %vm1142, %v1073, 0
        %v1153 = vsel %vm1142, %v1074, 0
        %v1156 = vsel %vm1142, %v1075, 0
        %v1159 = vsel %vm1142, %v1076, 0
        %v1162 = vsel %vm1142, %v1077, 0
        %v1165 = vsel %vm1142, %v1078, 0
        %v1168 = vsel %vm1142, %v1079, 0
        %v1171 = vsel %vm1142, %v1080, 0
        %v1174 = vsel %vm1142, %v1081, 0
        %v1177 = vsel %vm1142, %v1082, 0
        %v1180 = vsel %vm1142, %v1083, 0
        %v1183 = vsel %vm1142, %v1084, 0
        %v1186 = vsel %vm1142, %v1085, 0
        %v1189 = vsel %vm1142, %v1086, 0
        %v1192 = vsel %vm1142, %v1087, 0
        %v1195 = vsel %vm1142, %v1088, 0
        %v1198 = vsel %vm1142, %v1089, 0
        %v1201 = vsel %vm1142, %v1090, 0
        %v1204 = vsel %vm1142, %v1091, 0
        %v1207 = vsel %vm1142, %v1092, 0
        %v1210 = vsel %vm1142, %v1093, 0
        %v1213 = vsel %vm1142, %v1094, 0
        %v1216 = vsel %vm1142, %v1095, 0
        %v1219 = vsel %vm1142, %v1096, 0
        %v1222 = vsel %vm1142, %v1097, 0
        %v1225 = vsel %vm1142, %v1098, 0
        %v1228 = vsel %vm1142, %v1099, 0
        %v1231 = vsel %vm1142, %v1100, 0
        %v1234 = vsel %vm1142, %v1101, 0
        %v1237 = vsel %vm1142, %v1102, 0
        %1239 = vmatprep.subr.bf16.mxu0 0
        %1240 = vmatpush1.bf16.msra.mxu0 %v1134
        %1241 = vmatprep.subr.bf16.mxu0 0
        %1242 = vmatpush1.bf16.msra.mxu0 %v1135
        %1243 = vmatprep.subr.bf16.mxu0 0
        %1244 = vmatpush1.bf16.msra.mxu0 %v1136
        %1245 = vmatprep.subr.bf16.mxu0 0
        %1246 = vmatpush1.bf16.msra.mxu0 %v1137
        %1247 = vmatprep.subr.bf16.mxu0 0
        %1248 = vmatpush1.bf16.msra.mxu0 0
        %1249 = vmatprep.subr.bf16.mxu0 0
        %1250 = vmatpush1.bf16.msra.mxu0 0
        %1251 = vmatprep.subr.bf16.mxu0 0
        %1252 = vmatpush1.bf16.msra.mxu0 0
        %1253 = vmatprep.subr.bf16.mxu0 0
        %1254 = vmatpush1.bf16.msra.mxu0 0
        %1255 = vmatprep.subr.bf16.mxu0 0
        %1256 = vmatpush1.bf16.msra.mxu0 0
        %1257 = vmatprep.subr.bf16.mxu0 0
        %1258 = vmatpush1.bf16.msra.mxu0 0
        %1259 = vmatprep.subr.bf16.mxu0 0
        %1260 = vmatpush1.bf16.msra.mxu0 0
        %1261 = vmatprep.subr.bf16.mxu0 0
        %1262 = vmatpush1.bf16.msra.mxu0 0
        %1263 = vmatprep.subr.bf16.mxu0 0
        %1264 = vmatpush1.bf16.msra.mxu0 0
        %1265 = vmatprep.subr.bf16.mxu0 0
        %1266 = vmatpush1.bf16.msra.mxu0 0
        %1267 = vmatprep.subr.bf16.mxu0 0
        %1268 = vmatpush1.bf16.msra.mxu0 0
        %1269 = vmatprep.subr.bf16.mxu0 0
        %1270 = vmatpush1.bf16.msra.mxu0 0
        %1271 = vmatprep.mubr.bf16.mxu0 0
        %1272 = vmatmul.mubr.bf16.gmra.mrb[0].mxu0 %v1144
        %v1273 = vpop.f32.mrb[0].mxu0
        %v1274 = vadd.f32 %v1116, %v1273
        %v1275 = vpop.f32.mrb[0].mxu0
        %v1276 = vpop.f32.mrb[0].mxu0
        %v1277 = vadd.f32 %v1116, %v1276
        %v1278 = vpop.f32.mrb[0].mxu0
        %1279 = vmatprep.mubr.bf16.mxu0 0
        %1280 = vmatmul.mubr.bf16.gmra.mrb[0].mxu0 %v1147
        %v1281 = vpop.f32.mrb[0].mxu0
        %v1282 = vadd.f32 %v1116, %v1281
        %v1283 = vpop.f32.mrb[0].mxu0
        %v1284 = vpop.f32.mrb[0].mxu0
        %v1285 = vadd.f32 %v1116, %v1284
        %v1286 = vpop.f32.mrb[0].mxu0
        %1287 = vmatprep.mubr.bf16.mxu0 0
        %1288 = vmatmul.mubr.bf16.gmra.mrb[0].mxu0 %v1150
        %v1289 = vpop.f32.mrb[0].mxu0
        %v1290 = vadd.f32 %v1116, %v1289
        %v1291 = vpop.f32.mrb[0].mxu0
        %v1292 = vpop.f32.mrb[0].mxu0
        %v1293 = vadd.f32 %v1116, %v1292
        %v1294 = vpop.f32.mrb[0].mxu0
        %1295 = vmatprep.mubr.bf16.mxu0 0
        %1296 = vmatmul.mubr.bf16.gmra.mrb[0].mxu0 %v1153
        %v1297 = vpop.f32.mrb[0].mxu0
        %v1298 = vadd.f32 %v1116, %v1297
        %v1299 = vpop.f32.mrb[0].mxu0
        %v1300 = vpop.f32.mrb[0].mxu0
        %v1301 = vadd.f32 %v1116, %v1300
        %v1302 = vpop.f32.mrb[0].mxu0
        %1303 = vmatprep.mubr.bf16.mxu0 0
        %1304 = vmatmul.mubr.bf16.gmra.mrb[0].mxu0 %v1156
        %v1305 = vpop.f32.mrb[0].mxu0
        %v1306 = vadd.f32 %v1116, %v1305
        %v1307 = vpop.f32.mrb[0].mxu0
        %v1308 = vpop.f32.mrb[0].mxu0
        %v1309 = vadd.f32 %v1116, %v1308
        %v1310 = vpop.f32.mrb[0].mxu0
        %1311 = vmatprep.mubr.bf16.mxu0 0
        %1312 = vmatmul.mubr.bf16.gmra.mrb[0].mxu0 %v1159
        %v1313 = vpop.f32.mrb[0].mxu0
        %v1314 = vadd.f32 %v1116, %v1313
        %v1315 = vpop.f32.mrb[0].mxu0
        %v1316 = vpop.f32.mrb[0].mxu0
        %v1317 = vadd.f32 %v1116, %v1316
        %v1318 = vpop.f32.mrb[0].mxu0
        %1319 = vmatprep.mubr.bf16.mxu0 0
        %1320 = vmatmul.mubr.bf16.gmra.mrb[0].mxu0 %v1162
        %v1321 = vpop.f32.mrb[0].mxu0
        %v1322 = vadd.f32 %v1116, %v1321
        %v1323 = vpop.f32.mrb[0].mxu0
        %v1324 = vpop.f32.mrb[0].mxu0
        %v1325 = vadd.f32 %v1116, %v1324
        %v1326 = vpop.f32.mrb[0].mxu0
        %1327 = vmatprep.mubr.bf16.mxu0 0
        %1328 = vmatmul.mubr.bf16.gmra.mrb[0].mxu0 %v1165
        %v1329 = vpop.f32.mrb[0].mxu0
        %v1330 = vadd.f32 %v1116, %v1329
        %v1331 = vpop.f32.mrb[0].mxu0
        %v1332 = vpop.f32.mrb[0].mxu0
        %v1333 = vadd.f32 %v1116, %v1332
        %v1334 = vpop.f32.mrb[0].mxu0
        %1335 = vmatprep.mubr.bf16.mxu0 0
        %1336 = vmatmul.mubr.bf16.gmra.mrb[0].mxu0 %v1168
        %v1337 = vpop.f32.mrb[0].mxu0
        %v1338 = vadd.f32 %v1116, %v1337
        %v1339 = vpop.f32.mrb[0].mxu0
        %v1340 = vpop.f32.mrb[0].mxu0
        %v1341 = vadd.f32 %v1116, %v1340
        %v1342 = vpop.f32.mrb[0].mxu0
        %1343 = vmatprep.mubr.bf16.mxu0 0
        %1344 = vmatmul.mubr.bf16.gmra.mrb[0].mxu0 %v1171
        %v1345 = vpop.f32.mrb[0].mxu0
        %v1346 = vadd.f32 %v1116, %v1345
        %v1347 = vpop.f32.mrb[0].mxu0
        %v1348 = vpop.f32.mrb[0].mxu0
        %v1349 = vadd.f32 %v1116, %v1348
        %v1350 = vpop.f32.mrb[0].mxu0
        %1351 = vmatprep.mubr.bf16.mxu0 0
        %1352 = vmatmul.mubr.bf16.gmra.mrb[0].mxu0 %v1174
        %v1353 = vpop.f32.mrb[0].mxu0
        %v1354 = vadd.f32 %v1116, %v1353
        %v1355 = vpop.f32.mrb[0].mxu0
        %v1356 = vpop.f32.mrb[0].mxu0
        %v1357 = vadd.f32 %v1116, %v1356
        %v1358 = vpop.f32.mrb[0].mxu0
        %1359 = vmatprep.mubr.bf16.mxu0 0
        %1360 = vmatmul.mubr.bf16.gmra.mrb[0].mxu0 %v1177
        %v1361 = vpop.f32.mrb[0].mxu0
        %v1362 = vadd.f32 %v1116, %v1361
        %v1363 = vpop.f32.mrb[0].mxu0
        %v1364 = vpop.f32.mrb[0].mxu0
        %v1365 = vadd.f32 %v1116, %v1364
        %v1366 = vpop.f32.mrb[0].mxu0
        %1367 = vmatprep.mubr.bf16.mxu0 0
        %1368 = vmatmul.mubr.bf16.gmra.mrb[0].mxu0 %v1180
        %v1369 = vpop.f32.mrb[0].mxu0
        %v1370 = vadd.f32 %v1116, %v1369
        %v1371 = vpop.f32.mrb[0].mxu0
        %v1372 = vpop.f32.mrb[0].mxu0
        %v1373 = vadd.f32 %v1116, %v1372
        %v1374 = vpop.f32.mrb[0].mxu0
        %1375 = vmatprep.mubr.bf16.mxu0 0
        %1376 = vmatmul.mubr.bf16.gmra.mrb[0].mxu0 %v1183
        %v1377 = vpop.f32.mrb[0].mxu0
        %v1378 = vadd.f32 %v1116, %v1377
        %v1379 = vpop.f32.mrb[0].mxu0
        %v1380 = vpop.f32.mrb[0].mxu0
        %v1381 = vadd.f32 %v1116, %v1380
        %v1382 = vpop.f32.mrb[0].mxu0
        %1383 = vmatprep.mubr.bf16.mxu0 0
        %1384 = vmatmul.mubr.bf16.gmra.mrb[0].mxu0 %v1186
        %v1385 = vpop.f32.mrb[0].mxu0
        %v1386 = vadd.f32 %v1116, %v1385
        %v1387 = vpop.f32.mrb[0].mxu0
        %v1388 = vpop.f32.mrb[0].mxu0
        %v1389 = vadd.f32 %v1116, %v1388
        %v1390 = vpop.f32.mrb[0].mxu0
        %1391 = vmatprep.mubr.bf16.mxu0 0
        %1392 = vmatmul.mubr.bf16.gmra.mrb[0].mxu0 %v1189
        %v1393 = vpop.f32.mrb[0].mxu0
        %v1394 = vadd.f32 %v1116, %v1393
        %v1395 = vpop.f32.mrb[0].mxu0
        %v1396 = vpop.f32.mrb[0].mxu0
        %v1397 = vadd.f32 %v1116, %v1396
        %v1398 = vpop.f32.mrb[0].mxu0
        %1399 = vmatprep.mubr.bf16.mxu0 0
        %1400 = vmatmul.mubr.bf16.gmra.mrb[0].mxu0 %v1192
        %v1401 = vpop.f32.mrb[0].mxu0
        %v1402 = vadd.f32 %v1116, %v1401
        %v1403 = vpop.f32.mrb[0].mxu0
        %v1404 = vpop.f32.mrb[0].mxu0
        %v1405 = vadd.f32 %v1116, %v1404
        %v1406 = vpop.f32.mrb[0].mxu0
        %1407 = vmatprep.mubr.bf16.mxu0 0
        %1408 = vmatmul.mubr.bf16.gmra.mrb[0].mxu0 %v1195
        %v1409 = vpop.f32.mrb[0].mxu0
        %v1410 = vadd.f32 %v1116, %v1409
        %v1411 = vpop.f32.mrb[0].mxu0
        %v1412 = vpop.f32.mrb[0].mxu0
        %v1413 = vadd.f32 %v1116, %v1412
        %v1414 = vpop.f32.mrb[0].mxu0
        %1415 = vmatprep.mubr.bf16.mxu0 0
        %1416 = vmatmul.mubr.bf16.gmra.mrb[0].mxu0 %v1198
        %v1417 = vpop.f32.mrb[0].mxu0
        %v1418 = vadd.f32 %v1116, %v1417
        %v1419 = vpop.f32.mrb[0].mxu0
        %v1420 = vpop.f32.mrb[0].mxu0
        %v1421 = vadd.f32 %v1116, %v1420
        %v1422 = vpop.f32.mrb[0].mxu0
        %1423 = vmatprep.mubr.bf16.mxu0 0
        %1424 = vmatmul.mubr.bf16.gmra.mrb[0].mxu0 %v1201
        %v1425 = vpop.f32.mrb[0].mxu0
        %v1426 = vadd.f32 %v1116, %v1425
        %v1427 = vpop.f32.mrb[0].mxu0
        %v1428 = vpop.f32.mrb[0].mxu0
        %v1429 = vadd.f32 %v1116, %v1428
        %v1430 = vpop.f32.mrb[0].mxu0
        %1431 = vmatprep.mubr.bf16.mxu0 0
        %1432 = vmatmul.mubr.bf16.gmra.mrb[0].mxu0 %v1204
        %v1433 = vpop.f32.mrb[0].mxu0
        %v1434 = vadd.f32 %v1116, %v1433
        %v1435 = vpop.f32.mrb[0].mxu0
        %v1436 = vpop.f32.mrb[0].mxu0
        %v1437 = vadd.f32 %v1116, %v1436
        %v1438 = vpop.f32.mrb[0].mxu0
        %1439 = vmatprep.mubr.bf16.mxu0 0
        %1440 = vmatmul.mubr.bf16.gmra.mrb[0].mxu0 %v1207
        %v1441 = vpop.f32.mrb[0].mxu0
        %v1442 = vadd.f32 %v1116, %v1441
        %v1443 = vpop.f32.mrb[0].mxu0
        %v1444 = vpop.f32.mrb[0].mxu0
        %v1445 = vadd.f32 %v1116, %v1444
        %v1446 = vpop.f32.mrb[0].mxu0
        %1447 = vmatprep.mubr.bf16.mxu0 0
        %1448 = vmatmul.mubr.bf16.gmra.mrb[0].mxu0 %v1210
        %v1449 = vpop.f32.mrb[0].mxu0
        %v1450 = vadd.f32 %v1116, %v1449
        %v1451 = vpop.f32.mrb[0].mxu0
        %v1452 = vpop.f32.mrb[0].mxu0
        %v1453 = vadd.f32 %v1116, %v1452
        %v1454 = vpop.f32.mrb[0].mxu0
        %1455 = vmatprep.mubr.bf16.mxu0 0
        %1456 = vmatmul.mubr.bf16.gmra.mrb[0].mxu0 %v1213
        %v1457 = vpop.f32.mrb[0].mxu0
        %v1458 = vadd.f32 %v1116, %v1457
        %v1459 = vpop.f32.mrb[0].mxu0
        %v1460 = vpop.f32.mrb[0].mxu0
        %v1461 = vadd.f32 %v1116, %v1460
        %v1462 = vpop.f32.mrb[0].mxu0
        %1463 = vmatprep.mubr.bf16.mxu0 0
        %1464 = vmatmul.mubr.bf16.gmra.mrb[0].mxu0 %v1216
        %v1465 = vpop.f32.mrb[0].mxu0
        %v1466 = vadd.f32 %v1116, %v1465
        %v1467 = vpop.f32.mrb[0].mxu0
        %v1468 = vpop.f32.mrb[0].mxu0
        %v1469 = vadd.f32 %v1116, %v1468
        %v1470 = vpop.f32.mrb[0].mxu0
        %1471 = vmatprep.mubr.bf16.mxu0 0
        %1472 = vmatmul.mubr.bf16.gmra.mrb[0].mxu0 %v1219
        %v1473 = vpop.f32.mrb[0].mxu0
        %v1474 = vadd.f32 %v1116, %v1473
        %v1475 = vpop.f32.mrb[0].mxu0
        %v1476 = vpop.f32.mrb[0].mxu0
        %v1477 = vadd.f32 %v1116, %v1476
        %v1478 = vpop.f32.mrb[0].mxu0
        %1479 = vmatprep.mubr.bf16.mxu0 0
        %1480 = vmatmul.mubr.bf16.gmra.mrb[0].mxu0 %v1222
        %v1481 = vpop.f32.mrb[0].mxu0
        %v1482 = vadd.f32 %v1116, %v1481
        %v1483 = vpop.f32.mrb[0].mxu0
        %v1484 = vpop.f32.mrb[0].mxu0
        %v1485 = vadd.f32 %v1116, %v1484
        %v1486 = vpop.f32.mrb[0].mxu0
        %1487 = vmatprep.mubr.bf16.mxu0 0
        %1488 = vmatmul.mubr.bf16.gmra.mrb[0].mxu0 %v1225
        %v1489 = vpop.f32.mrb[0].mxu0
        %v1490 = vadd.f32 %v1116, %v1489
        %v1491 = vpop.f32.mrb[0].mxu0
        %v1492 = vpop.f32.mrb[0].mxu0
        %v1493 = vadd.f32 %v1116, %v1492
        %v1494 = vpop.f32.mrb[0].mxu0
        %1495 = vmatprep.mubr.bf16.mxu0 0
        %1496 = vmatmul.mubr.bf16.gmra.mrb[0].mxu0 %v1228
        %v1497 = vpop.f32.mrb[0].mxu0
        %v1498 = vadd.f32 %v1116, %v1497
        %v1499 = vpop.f32.mrb[0].mxu0
        %v1500 = vpop.f32.mrb[0].mxu0
        %v1501 = vadd.f32 %v1116, %v1500
        %v1502 = vpop.f32.mrb[0].mxu0
        %1503 = vmatprep.mubr.bf16.mxu0 0
        %1504 = vmatmul.mubr.bf16.gmra.mrb[0].mxu0 %v1231
        %v1505 = vpop.f32.mrb[0].mxu0
        %v1506 = vadd.f32 %v1116, %v1505
        %v1507 = vpop.f32.mrb[0].mxu0
        %v1508 = vpop.f32.mrb[0].mxu0
        %v1509 = vadd.f32 %v1116, %v1508
        %v1510 = vpop.f32.mrb[0].mxu0
        %1511 = vmatprep.mubr.bf16.mxu0 0
        %1512 = vmatmul.mubr.bf16.gmra.mrb[0].mxu0 %v1234
        %v1513 = vpop.f32.mrb[0].mxu0
        %v1514 = vadd.f32 %v1116, %v1513
        %v1515 = vpop.f32.mrb[0].mxu0
        %v1516 = vpop.f32.mrb[0].mxu0
        %v1517 = vadd.f32 %v1116, %v1516
        %v1518 = vpop.f32.mrb[0].mxu0
        %1519 = vmatprep.mubr.bf16.mxu0 0
        %1520 = vmatmul.mubr.bf16.gmra.mrb[0].mxu0 %v1237
        %v1521 = vpop.f32.mrb[0].mxu0
        %v1522 = vadd.f32 %v1116, %v1521
        %v1523 = vpop.f32.mrb[0].mxu0
        %v1524 = vpop.f32.mrb[0].mxu0
        %v1525 = vadd.f32 %v1116, %v1524
        %v1526 = vpop.f32.mrb[0].mxu0
        %1527 = vdwg.mxu0
        %v1528 = vmax.f32 %v1274, 0.0
        %v1529 = vmax.f32 %v1277, 0.0
        %v1530 = vmax.f32 %v1282, 0.0
        %v1531 = vmax.f32 %v1285, 0.0
        %v1532 = vmax.f32 %v1290, 0.0
        %v1533 = vmax.f32 %v1293, 0.0
        %v1534 = vmax.f32 %v1298, 0.0
        %v1535 = vmax.f32 %v1301, 0.0
        %v1536 = vmax.f32 %v1306, 0.0
        %v1537 = vmax.f32 %v1309, 0.0
        %v1538 = vmax.f32 %v1314, 0.0
        %v1539 = vmax.f32 %v1317, 0.0
        %v1540 = vmax.f32 %v1322, 0.0
        %v1541 = vmax.f32 %v1325, 0.0
        %v1542 = vmax.f32 %v1330, 0.0
        %v1543 = vmax.f32 %v1333, 0.0
        %v1544 = vmax.f32 %v1338, 0.0
        %v1545 = vmax.f32 %v1341, 0.0
        %v1546 = vmax.f32 %v1346, 0.0
        %v1547 = vmax.f32 %v1349, 0.0
        %v1548 = vmax.f32 %v1354, 0.0
        %v1549 = vmax.f32 %v1357, 0.0
        %v1550 = vmax.f32 %v1362, 0.0
        %v1551 = vmax.f32 %v1365, 0.0
        %v1552 = vmax.f32 %v1370, 0.0
        %v1553 = vmax.f32 %v1373, 0.0
        %v1554 = vmax.f32 %v1378, 0.0
        %v1555 = vmax.f32 %v1381, 0.0
        %v1556 = vmax.f32 %v1386, 0.0
        %v1557 = vmax.f32 %v1389, 0.0
        %v1558 = vmax.f32 %v1394, 0.0
        %v1559 = vmax.f32 %v1397, 0.0
        %v1560 = vmax.f32 %v1402, 0.0
        %v1561 = vmax.f32 %v1405, 0.0
        %v1562 = vmax.f32 %v1410, 0.0
        %v1563 = vmax.f32 %v1413, 0.0
        %v1564 = vmax.f32 %v1418, 0.0
        %v1565 = vmax.f32 %v1421, 0.0
        %v1566 = vmax.f32 %v1426, 0.0
        %v1567 = vmax.f32 %v1429, 0.0
        %v1568 = vmax.f32 %v1434, 0.0
        %v1569 = vmax.f32 %v1437, 0.0
        %v1570 = vmax.f32 %v1442, 0.0
        %v1571 = vmax.f32 %v1445, 0.0
        %v1572 = vmax.f32 %v1450, 0.0
        %v1573 = vmax.f32 %v1453, 0.0
        %v1574 = vmax.f32 %v1458, 0.0
        %v1575 = vmax.f32 %v1461, 0.0
        %v1576 = vmax.f32 %v1466, 0.0
        %v1577 = vmax.f32 %v1469, 0.0
        %v1578 = vmax.f32 %v1474, 0.0
        %v1579 = vmax.f32 %v1477, 0.0
        %v1580 = vmax.f32 %v1482, 0.0
        %v1581 = vmax.f32 %v1485, 0.0
        %v1582 = vmax.f32 %v1490, 0.0
        %v1583 = vmax.f32 %v1493, 0.0
        %v1584 = vmax.f32 %v1498, 0.0
        %v1585 = vmax.f32 %v1501, 0.0
        %v1586 = vmax.f32 %v1506, 0.0
        %v1587 = vmax.f32 %v1509, 0.0
        %v1588 = vmax.f32 %v1514, 0.0
        %v1589 = vmax.f32 %v1517, 0.0
        %v1590 = vmax.f32 %v1522, 0.0
        %v1591 = vmax.f32 %v1525, 0.0
        %v1592 = vpack.c.bf16 %v1529, %v1528
        %v1593 = vpack.c.bf16 %v1531, %v1530
        %v1594 = vpack.c.bf16 %v1533, %v1532
        %v1595 = vpack.c.bf16 %v1535, %v1534
        %v1596 = vpack.c.bf16 %v1537, %v1536
        %v1597 = vpack.c.bf16 %v1539, %v1538
        %v1598 = vpack.c.bf16 %v1541, %v1540
        %v1599 = vpack.c.bf16 %v1543, %v1542
        %v1600 = vpack.c.bf16 %v1545, %v1544
        %v1601 = vpack.c.bf16 %v1547, %v1546
        %v1602 = vpack.c.bf16 %v1549, %v1548
        %v1603 = vpack.c.bf16 %v1551, %v1550
        %v1604 = vpack.c.bf16 %v1553, %v1552
        %v1605 = vpack.c.bf16 %v1555, %v1554
        %v1606 = vpack.c.bf16 %v1557, %v1556
        %v1607 = vpack.c.bf16 %v1559, %v1558
        %v1608 = vpack.c.bf16 %v1561, %v1560
        %v1609 = vpack.c.bf16 %v1563, %v1562
        %v1610 = vpack.c.bf16 %v1565, %v1564
        %v1611 = vpack.c.bf16 %v1567, %v1566
        %v1612 = vpack.c.bf16 %v1569, %v1568
        %v1613 = vpack.c.bf16 %v1571, %v1570
        %v1614 = vpack.c.bf16 %v1573, %v1572
        %v1615 = vpack.c.bf16 %v1575, %v1574
        %v1616 = vpack.c.bf16 %v1577, %v1576
        %v1617 = vpack.c.bf16 %v1579, %v1578
        %v1618 = vpack.c.bf16 %v1581, %v1580
        %v1619 = vpack.c.bf16 %v1583, %v1582
        %v1620 = vpack.c.bf16 %v1585, %v1584
        %v1621 = vpack.c.bf16 %v1587, %v1586
        %v1622 = vpack.c.bf16 %v1589, %v1588
        %v1623 = vpack.c.bf16 %v1591, %v1590
        %v1624 = vld [vmem:[%s5] sm:$0xf]
        %v1625 = vld [vmem:[%s5 + $0x4] sm:$0xf]
        %v1626 = vld [vmem:[%s5 + $0x8] sm:$0xf]
        %v1627 = vld [vmem:[%s5 + $0xc] sm:$0xf]
        %v1628 = vld [vmem:[%s5 + $0x10] sm:$0xf]
        %v1629 = vld [vmem:[%s5 + $0x14] sm:$0xf]
        %v1630 = vld [vmem:[%s5 + $0x18] sm:$0xf]
        %v1631 = vld [vmem:[%s5 + $0x1c] sm:$0xf]
        %v1632 = vld [vmem:[%s6] sm:$0x1]
        %v1634 = vlaneseq
        %v1635 = vshrl.u32 %v1634, 7
        %v1636 = vsub.s32 0, %v1635
        %v1637 = vrot.slane %v1632, %v1636
        %v1647 = vunpack.c.l.b16 %v1624
        %v1648 = vunpack.c.l.b16 %v1625
        %v1649 = vunpack.c.l.b16 %v1626
        %v1650 = vunpack.c.l.b16 %v1627
        %v1651 = vunpack.c.l.b16 %v1628
        %v1652 = vunpack.c.l.b16 %v1629
        %v1653 = vunpack.c.l.b16 %v1630
        %v1654 = vunpack.c.l.b16 %v1631
        %v1655 = vpack.c.b16 %v1648, %v1647
        %v1656 = vpack.c.b16 %v1650, %v1649
        %v1657 = vpack.c.b16 %v1652, %v1651
        %v1658 = vpack.c.b16 %v1654, %v1653
        %v1664 = vsel %vm1142, %v1592, 0
        %v1667 = vsel %vm1142, %v1593, 0
        %v1670 = vsel %vm1142, %v1594, 0
        %v1673 = vsel %vm1142, %v1595, 0
        %v1676 = vsel %vm1142, %v1596, 0
        %v1679 = vsel %vm1142, %v1597, 0
        %v1682 = vsel %vm1142, %v1598, 0
        %v1685 = vsel %vm1142, %v1599, 0
        %v1688 = vsel %vm1142, %v1600, 0
        %v1691 = vsel %vm1142, %v1601, 0
        %v1694 = vsel %vm1142, %v1602, 0
        %v1697 = vsel %vm1142, %v1603, 0
        %v1700 = vsel %vm1142, %v1604, 0
        %v1703 = vsel %vm1142, %v1605, 0
        %v1706 = vsel %vm1142, %v1606, 0
        %v1709 = vsel %vm1142, %v1607, 0
        %v1712 = vsel %vm1142, %v1608, 0
        %v1715 = vsel %vm1142, %v1609, 0
        %v1718 = vsel %vm1142, %v1610, 0
        %v1721 = vsel %vm1142, %v1611, 0
        %v1724 = vsel %vm1142, %v1612, 0
        %v1727 = vsel %vm1142, %v1613, 0
        %v1730 = vsel %vm1142, %v1614, 0
        %v1733 = vsel %vm1142, %v1615, 0
        %v1736 = vsel %vm1142, %v1616, 0
        %v1739 = vsel %vm1142, %v1617, 0
        %v1742 = vsel %vm1142, %v1618, 0
        %v1745 = vsel %vm1142, %v1619, 0
        %v1748 = vsel %vm1142, %v1620, 0
        %v1751 = vsel %vm1142, %v1621, 0
        %v1754 = vsel %vm1142, %v1622, 0
        %v1757 = vsel %vm1142, %v1623, 0
        %1759 = vmatprep.subr.bf16.mxu0 0
        %1760 = vmatpush1.bf16.msra.mxu0 %v1655
        %1761 = vmatprep.subr.bf16.mxu0 0
        %1762 = vmatpush1.bf16.msra.mxu0 %v1656
        %1763 = vmatprep.subr.bf16.mxu0 0
        %1764 = vmatpush1.bf16.msra.mxu0 %v1657
        %1765 = vmatprep.subr.bf16.mxu0 0
        %1766 = vmatpush1.bf16.msra.mxu0 %v1658
        %1767 = vmatprep.subr.bf16.mxu0 0
        %1768 = vmatpush1.bf16.msra.mxu0 0
        %1769 = vmatprep.subr.bf16.mxu0 0
        %1770 = vmatpush1.bf16.msra.mxu0 0
        %1771 = vmatprep.subr.bf16.mxu0 0
        %1772 = vmatpush1.bf16.msra.mxu0 0
        %1773 = vmatprep.subr.bf16.mxu0 0
        %1774 = vmatpush1.bf16.msra.mxu0 0
        %1775 = vmatprep.subr.bf16.mxu0 0
        %1776 = vmatpush1.bf16.msra.mxu0 0
        %1777 = vmatprep.subr.bf16.mxu0 0
        %1778 = vmatpush1.bf16.msra.mxu0 0
        %1779 = vmatprep.subr.bf16.mxu0 0
        %1780 = vmatpush1.bf16.msra.mxu0 0
        %1781 = vmatprep.subr.bf16.mxu0 0
        %1782 = vmatpush1.bf16.msra.mxu0 0
        %1783 = vmatprep.subr.bf16.mxu0 0
        %1784 = vmatpush1.bf16.msra.mxu0 0
        %1785 = vmatprep.subr.bf16.mxu0 0
        %1786 = vmatpush1.bf16.msra.mxu0 0
        %1787 = vmatprep.subr.bf16.mxu0 0
        %1788 = vmatpush1.bf16.msra.mxu0 0
        %1789 = vmatprep.subr.bf16.mxu0 0
        %1790 = vmatpush1.bf16.msra.mxu0 0
        %1791 = vmatprep.mubr.bf16.mxu0 0
        %1792 = vmatmul.mubr.bf16.gmra.mrb[0].mxu0 %v1664
        %v1793 = vpop.f32.mrb[0].mxu0
        %v1794 = vadd.f32 %v1637, %v1793
        %v1795 = vpop.f32.mrb[0].mxu0
        %v1796 = vpop.f32.mrb[0].mxu0
        %v1797 = vadd.f32 %v1637, %v1796
        %v1798 = vpop.f32.mrb[0].mxu0
        %1799 = vmatprep.mubr.bf16.mxu0 0
        %1800 = vmatmul.mubr.bf16.gmra.mrb[0].mxu0 %v1667
        %v1801 = vpop.f32.mrb[0].mxu0
        %v1802 = vadd.f32 %v1637, %v1801
        %v1803 = vpop.f32.mrb[0].mxu0
        %v1804 = vpop.f32.mrb[0].mxu0
        %v1805 = vadd.f32 %v1637, %v1804
        %v1806 = vpop.f32.mrb[0].mxu0
        %1807 = vmatprep.mubr.bf16.mxu0 0
        %1808 = vmatmul.mubr.bf16.gmra.mrb[0].mxu0 %v1670
        %v1809 = vpop.f32.mrb[0].mxu0
        %v1810 = vadd.f32 %v1637, %v1809
        %v1811 = vpop.f32.mrb[0].mxu0
        %v1812 = vpop.f32.mrb[0].mxu0
        %v1813 = vadd.f32 %v1637, %v1812
        %v1814 = vpop.f32.mrb[0].mxu0
        %1815 = vmatprep.mubr.bf16.mxu0 0
        %1816 = vmatmul.mubr.bf16.gmra.mrb[0].mxu0 %v1673
        %v1817 = vpop.f32.mrb[0].mxu0
        %v1818 = vadd.f32 %v1637, %v1817
        %v1819 = vpop.f32.mrb[0].mxu0
        %v1820 = vpop.f32.mrb[0].mxu0
        %v1821 = vadd.f32 %v1637, %v1820
        %v1822 = vpop.f32.mrb[0].mxu0
        %1823 = vmatprep.mubr.bf16.mxu0 0
        %1824 = vmatmul.mubr.bf16.gmra.mrb[0].mxu0 %v1676
        %v1825 = vpop.f32.mrb[0].mxu0
        %v1826 = vadd.f32 %v1637, %v1825
        %v1827 = vpop.f32.mrb[0].mxu0
        %v1828 = vpop.f32.mrb[0].mxu0
        %v1829 = vadd.f32 %v1637, %v1828
        %v1830 = vpop.f32.mrb[0].mxu0
        %1831 = vmatprep.mubr.bf16.mxu0 0
        %1832 = vmatmul.mubr.bf16.gmra.mrb[0].mxu0 %v1679
        %v1833 = vpop.f32.mrb[0].mxu0
        %v1834 = vadd.f32 %v1637, %v1833
        %v1835 = vpop.f32.mrb[0].mxu0
        %v1836 = vpop.f32.mrb[0].mxu0
        %v1837 = vadd.f32 %v1637, %v1836
        %v1838 = vpop.f32.mrb[0].mxu0
        %1839 = vmatprep.mubr.bf16.mxu0 0
        %1840 = vmatmul.mubr.bf16.gmra.mrb[0].mxu0 %v1682
        %v1841 = vpop.f32.mrb[0].mxu0
        %v1842 = vadd.f32 %v1637, %v1841
        %v1843 = vpop.f32.mrb[0].mxu0
        %v1844 = vpop.f32.mrb[0].mxu0
        %v1845 = vadd.f32 %v1637, %v1844
        %v1846 = vpop.f32.mrb[0].mxu0
        %1847 = vmatprep.mubr.bf16.mxu0 0
        %1848 = vmatmul.mubr.bf16.gmra.mrb[0].mxu0 %v1685
        %v1849 = vpop.f32.mrb[0].mxu0
        %v1850 = vadd.f32 %v1637, %v1849
        %v1851 = vpop.f32.mrb[0].mxu0
        %v1852 = vpop.f32.mrb[0].mxu0
        %v1853 = vadd.f32 %v1637, %v1852
        %v1854 = vpop.f32.mrb[0].mxu0
        %1855 = vmatprep.mubr.bf16.mxu0 0
        %1856 = vmatmul.mubr.bf16.gmra.mrb[0].mxu0 %v1688
        %v1857 = vpop.f32.mrb[0].mxu0
        %v1858 = vadd.f32 %v1637, %v1857
        %v1859 = vpop.f32.mrb[0].mxu0
        %v1860 = vpop.f32.mrb[0].mxu0
        %v1861 = vadd.f32 %v1637, %v1860
        %v1862 = vpop.f32.mrb[0].mxu0
        %1863 = vmatprep.mubr.bf16.mxu0 0
        %1864 = vmatmul.mubr.bf16.gmra.mrb[0].mxu0 %v1691
        %v1865 = vpop.f32.mrb[0].mxu0
        %v1866 = vadd.f32 %v1637, %v1865
        %v1867 = vpop.f32.mrb[0].mxu0
        %v1868 = vpop.f32.mrb[0].mxu0
        %v1869 = vadd.f32 %v1637, %v1868
        %v1870 = vpop.f32.mrb[0].mxu0
        %1871 = vmatprep.mubr.bf16.mxu0 0
        %1872 = vmatmul.mubr.bf16.gmra.mrb[0].mxu0 %v1694
        %v1873 = vpop.f32.mrb[0].mxu0
        %v1874 = vadd.f32 %v1637, %v1873
        %v1875 = vpop.f32.mrb[0].mxu0
        %v1876 = vpop.f32.mrb[0].mxu0
        %v1877 = vadd.f32 %v1637, %v1876
        %v1878 = vpop.f32.mrb[0].mxu0
        %1879 = vmatprep.mubr.bf16.mxu0 0
        %1880 = vmatmul.mubr.bf16.gmra.mrb[0].mxu0 %v1697
        %v1881 = vpop.f32.mrb[0].mxu0
        %v1882 = vadd.f32 %v1637, %v1881
        %v1883 = vpop.f32.mrb[0].mxu0
        %v1884 = vpop.f32.mrb[0].mxu0
        %v1885 = vadd.f32 %v1637, %v1884
        %v1886 = vpop.f32.mrb[0].mxu0
        %1887 = vmatprep.mubr.bf16.mxu0 0
        %1888 = vmatmul.mubr.bf16.gmra.mrb[0].mxu0 %v1700
        %v1889 = vpop.f32.mrb[0].mxu0
        %v1890 = vadd.f32 %v1637, %v1889
        %v1891 = vpop.f32.mrb[0].mxu0
        %v1892 = vpop.f32.mrb[0].mxu0
        %v1893 = vadd.f32 %v1637, %v1892
        %v1894 = vpop.f32.mrb[0].mxu0
        %1895 = vmatprep.mubr.bf16.mxu0 0
        %1896 = vmatmul.mubr.bf16.gmra.mrb[0].mxu0 %v1703
        %v1897 = vpop.f32.mrb[0].mxu0
        %v1898 = vadd.f32 %v1637, %v1897
        %v1899 = vpop.f32.mrb[0].mxu0
        %v1900 = vpop.f32.mrb[0].mxu0
        %v1901 = vadd.f32 %v1637, %v1900
        %v1902 = vpop.f32.mrb[0].mxu0
        %1903 = vmatprep.mubr.bf16.mxu0 0
        %1904 = vmatmul.mubr.bf16.gmra.mrb[0].mxu0 %v1706
        %v1905 = vpop.f32.mrb[0].mxu0
        %v1906 = vadd.f32 %v1637, %v1905
        %v1907 = vpop.f32.mrb[0].mxu0
        %v1908 = vpop.f32.mrb[0].mxu0
        %v1909 = vadd.f32 %v1637, %v1908
        %v1910 = vpop.f32.mrb[0].mxu0
        %1911 = vmatprep.mubr.bf16.mxu0 0
        %1912 = vmatmul.mubr.bf16.gmra.mrb[0].mxu0 %v1709
        %v1913 = vpop.f32.mrb[0].mxu0
        %v1914 = vadd.f32 %v1637, %v1913
        %v1915 = vpop.f32.mrb[0].mxu0
        %v1916 = vpop.f32.mrb[0].mxu0
        %v1917 = vadd.f32 %v1637, %v1916
        %v1918 = vpop.f32.mrb[0].mxu0
        %1919 = vmatprep.mubr.bf16.mxu0 0
        %1920 = vmatmul.mubr.bf16.gmra.mrb[0].mxu0 %v1712
        %v1921 = vpop.f32.mrb[0].mxu0
        %v1922 = vadd.f32 %v1637, %v1921
        %v1923 = vpop.f32.mrb[0].mxu0
        %v1924 = vpop.f32.mrb[0].mxu0
        %v1925 = vadd.f32 %v1637, %v1924
        %v1926 = vpop.f32.mrb[0].mxu0
        %1927 = vmatprep.mubr.bf16.mxu0 0
        %1928 = vmatmul.mubr.bf16.gmra.mrb[0].mxu0 %v1715
        %v1929 = vpop.f32.mrb[0].mxu0
        %v1930 = vadd.f32 %v1637, %v1929
        %v1931 = vpop.f32.mrb[0].mxu0
        %v1932 = vpop.f32.mrb[0].mxu0
        %v1933 = vadd.f32 %v1637, %v1932
        %v1934 = vpop.f32.mrb[0].mxu0
        %1935 = vmatprep.mubr.bf16.mxu0 0
        %1936 = vmatmul.mubr.bf16.gmra.mrb[0].mxu0 %v1718
        %v1937 = vpop.f32.mrb[0].mxu0
        %v1938 = vadd.f32 %v1637, %v1937
        %v1939 = vpop.f32.mrb[0].mxu0
        %v1940 = vpop.f32.mrb[0].mxu0
        %v1941 = vadd.f32 %v1637, %v1940
        %v1942 = vpop.f32.mrb[0].mxu0
        %1943 = vmatprep.mubr.bf16.mxu0 0
        %1944 = vmatmul.mubr.bf16.gmra.mrb[0].mxu0 %v1721
        %v1945 = vpop.f32.mrb[0].mxu0
        %v1946 = vadd.f32 %v1637, %v1945
        %v1947 = vpop.f32.mrb[0].mxu0
        %v1948 = vpop.f32.mrb[0].mxu0
        %v1949 = vadd.f32 %v1637, %v1948
        %v1950 = vpop.f32.mrb[0].mxu0
        %1951 = vmatprep.mubr.bf16.mxu0 0
        %1952 = vmatmul.mubr.bf16.gmra.mrb[0].mxu0 %v1724
        %v1953 = vpop.f32.mrb[0].mxu0
        %v1954 = vadd.f32 %v1637, %v1953
        %v1955 = vpop.f32.mrb[0].mxu0
        %v1956 = vpop.f32.mrb[0].mxu0
        %v1957 = vadd.f32 %v1637, %v1956
        %v1958 = vpop.f32.mrb[0].mxu0
        %1959 = vmatprep.mubr.bf16.mxu0 0
        %1960 = vmatmul.mubr.bf16.gmra.mrb[0].mxu0 %v1727
        %v1961 = vpop.f32.mrb[0].mxu0
        %v1962 = vadd.f32 %v1637, %v1961
        %v1963 = vpop.f32.mrb[0].mxu0
        %v1964 = vpop.f32.mrb[0].mxu0
        %v1965 = vadd.f32 %v1637, %v1964
        %v1966 = vpop.f32.mrb[0].mxu0
        %1967 = vmatprep.mubr.bf16.mxu0 0
        %1968 = vmatmul.mubr.bf16.gmra.mrb[0].mxu0 %v1730
        %v1969 = vpop.f32.mrb[0].mxu0
        %v1970 = vadd.f32 %v1637, %v1969
        %v1971 = vpop.f32.mrb[0].mxu0
        %v1972 = vpop.f32.mrb[0].mxu0
        %v1973 = vadd.f32 %v1637, %v1972
        %v1974 = vpop.f32.mrb[0].mxu0
        %1975 = vmatprep.mubr.bf16.mxu0 0
        %1976 = vmatmul.mubr.bf16.gmra.mrb[0].mxu0 %v1733
        %v1977 = vpop.f32.mrb[0].mxu0
        %v1978 = vadd.f32 %v1637, %v1977
        %v1979 = vpop.f32.mrb[0].mxu0
        %v1980 = vpop.f32.mrb[0].mxu0
        %v1981 = vadd.f32 %v1637, %v1980
        %v1982 = vpop.f32.mrb[0].mxu0
        %1983 = vmatprep.mubr.bf16.mxu0 0
        %1984 = vmatmul.mubr.bf16.gmra.mrb[0].mxu0 %v1736
        %v1985 = vpop.f32.mrb[0].mxu0
        %v1986 = vadd.f32 %v1637, %v1985
        %v1987 = vpop.f32.mrb[0].mxu0
        %v1988 = vpop.f32.mrb[0].mxu0
        %v1989 = vadd.f32 %v1637, %v1988
        %v1990 = vpop.f32.mrb[0].mxu0
        %1991 = vmatprep.mubr.bf16.mxu0 0
        %1992 = vmatmul.mubr.bf16.gmra.mrb[0].mxu0 %v1739
        %v1993 = vpop.f32.mrb[0].mxu0
        %v1994 = vadd.f32 %v1637, %v1993
        %v1995 = vpop.f32.mrb[0].mxu0
        %v1996 = vpop.f32.mrb[0].mxu0
        %v1997 = vadd.f32 %v1637, %v1996
        %v1998 = vpop.f32.mrb[0].mxu0
        %1999 = vmatprep.mubr.bf16.mxu0 0
        %2000 = vmatmul.mubr.bf16.gmra.mrb[0].mxu0 %v1742
        %v2001 = vpop.f32.mrb[0].mxu0
        %v2002 = vadd.f32 %v1637, %v2001
        %v2003 = vpop.f32.mrb[0].mxu0
        %v2004 = vpop.f32.mrb[0].mxu0
        %v2005 = vadd.f32 %v1637, %v2004
        %v2006 = vpop.f32.mrb[0].mxu0
        %2007 = vmatprep.mubr.bf16.mxu0 0
        %2008 = vmatmul.mubr.bf16.gmra.mrb[0].mxu0 %v1745
        %v2009 = vpop.f32.mrb[0].mxu0
        %v2010 = vadd.f32 %v1637, %v2009
        %v2011 = vpop.f32.mrb[0].mxu0
        %v2012 = vpop.f32.mrb[0].mxu0
        %v2013 = vadd.f32 %v1637, %v2012
        %v2014 = vpop.f32.mrb[0].mxu0
        %2015 = vmatprep.mubr.bf16.mxu0 0
        %2016 = vmatmul.mubr.bf16.gmra.mrb[0].mxu0 %v1748
        %v2017 = vpop.f32.mrb[0].mxu0
        %v2018 = vadd.f32 %v1637, %v2017
        %v2019 = vpop.f32.mrb[0].mxu0
        %v2020 = vpop.f32.mrb[0].mxu0
        %v2021 = vadd.f32 %v1637, %v2020
        %v2022 = vpop.f32.mrb[0].mxu0
        %2023 = vmatprep.mubr.bf16.mxu0 0
        %2024 = vmatmul.mubr.bf16.gmra.mrb[0].mxu0 %v1751
        %v2025 = vpop.f32.mrb[0].mxu0
        %v2026 = vadd.f32 %v1637, %v2025
        %v2027 = vpop.f32.mrb[0].mxu0
        %v2028 = vpop.f32.mrb[0].mxu0
        %v2029 = vadd.f32 %v1637, %v2028
        %v2030 = vpop.f32.mrb[0].mxu0
        %2031 = vmatprep.mubr.bf16.mxu0 0
        %2032 = vmatmul.mubr.bf16.gmra.mrb[0].mxu0 %v1754
        %v2033 = vpop.f32.mrb[0].mxu0
        %v2034 = vadd.f32 %v1637, %v2033
        %v2035 = vpop.f32.mrb[0].mxu0
        %v2036 = vpop.f32.mrb[0].mxu0
        %v2037 = vadd.f32 %v1637, %v2036
        %v2038 = vpop.f32.mrb[0].mxu0
        %2039 = vmatprep.mubr.bf16.mxu0 0
        %2040 = vmatmul.mubr.bf16.gmra.mrb[0].mxu0 %v1757
        %v2041 = vpop.f32.mrb[0].mxu0
        %v2042 = vadd.f32 %v1637, %v2041
        %v2043 = vpop.f32.mrb[0].mxu0
        %v2044 = vpop.f32.mrb[0].mxu0
        %v2045 = vadd.f32 %v1637, %v2044
        %v2046 = vpop.f32.mrb[0].mxu0
        %2047 = vdwg.mxu0
        %v2048 = vmax.f32 %v1794, 0.0
        %v2049 = vmax.f32 %v1797, 0.0
        %v2050 = vmax.f32 %v1802, 0.0
        %v2051 = vmax.f32 %v1805, 0.0
        %v2052 = vmax.f32 %v1810, 0.0
        %v2053 = vmax.f32 %v1813, 0.0
        %v2054 = vmax.f32 %v1818, 0.0
        %v2055 = vmax.f32 %v1821, 0.0
        %v2056 = vmax.f32 %v1826, 0.0
        %v2057 = vmax.f32 %v1829, 0.0
        %v2058 = vmax.f32 %v1834, 0.0
        %v2059 = vmax.f32 %v1837, 0.0
        %v2060 = vmax.f32 %v1842, 0.0
        %v2061 = vmax.f32 %v1845, 0.0
        %v2062 = vmax.f32 %v1850, 0.0
        %v2063 = vmax.f32 %v1853, 0.0
        %v2064 = vmax.f32 %v1858, 0.0
        %v2065 = vmax.f32 %v1861, 0.0
        %v2066 = vmax.f32 %v1866, 0.0
        %v2067 = vmax.f32 %v1869, 0.0
        %v2068 = vmax.f32 %v1874, 0.0
        %v2069 = vmax.f32 %v1877, 0.0
        %v2070 = vmax.f32 %v1882, 0.0
        %v2071 = vmax.f32 %v1885, 0.0
        %v2072 = vmax.f32 %v1890, 0.0
        %v2073 = vmax.f32 %v1893, 0.0
        %v2074 = vmax.f32 %v1898, 0.0
        %v2075 = vmax.f32 %v1901, 0.0
        %v2076 = vmax.f32 %v1906, 0.0
        %v2077 = vmax.f32 %v1909, 0.0
        %v2078 = vmax.f32 %v1914, 0.0
        %v2079 = vmax.f32 %v1917, 0.0
        %v2080 = vmax.f32 %v1922, 0.0
        %v2081 = vmax.f32 %v1925, 0.0
        %v2082 = vmax.f32 %v1930, 0.0
        %v2083 = vmax.f32 %v1933, 0.0
        %v2084 = vmax.f32 %v1938, 0.0
        %v2085 = vmax.f32 %v1941, 0.0
        %v2086 = vmax.f32 %v1946, 0.0
        %v2087 = vmax.f32 %v1949, 0.0
        %v2088 = vmax.f32 %v1954, 0.0
        %v2089 = vmax.f32 %v1957, 0.0
        %v2090 = vmax.f32 %v1962, 0.0
        %v2091 = vmax.f32 %v1965, 0.0
        %v2092 = vmax.f32 %v1970, 0.0
        %v2093 = vmax.f32 %v1973, 0.0
        %v2094 = vmax.f32 %v1978, 0.0
        %v2095 = vmax.f32 %v1981, 0.0
        %v2096 = vmax.f32 %v1986, 0.0
        %v2097 = vmax.f32 %v1989, 0.0
        %v2098 = vmax.f32 %v1994, 0.0
        %v2099 = vmax.f32 %v1997, 0.0
        %v2100 = vmax.f32 %v2002, 0.0
        %v2101 = vmax.f32 %v2005, 0.0
        %v2102 = vmax.f32 %v2010, 0.0
        %v2103 = vmax.f32 %v2013, 0.0
        %v2104 = vmax.f32 %v2018, 0.0
        %v2105 = vmax.f32 %v2021, 0.0
        %v2106 = vmax.f32 %v2026, 0.0
        %v2107 = vmax.f32 %v2029, 0.0
        %v2108 = vmax.f32 %v2034, 0.0
        %v2109 = vmax.f32 %v2037, 0.0
        %v2110 = vmax.f32 %v2042, 0.0
        %v2111 = vmax.f32 %v2045, 0.0
        %v2112 = vpack.c.bf16 %v2049, %v2048
        %v2113 = vpack.c.bf16 %v2051, %v2050
        %v2114 = vpack.c.bf16 %v2053, %v2052
        %v2115 = vpack.c.bf16 %v2055, %v2054
        %v2116 = vpack.c.bf16 %v2057, %v2056
        %v2117 = vpack.c.bf16 %v2059, %v2058
        %v2118 = vpack.c.bf16 %v2061, %v2060
        %v2119 = vpack.c.bf16 %v2063, %v2062
        %v2120 = vpack.c.bf16 %v2065, %v2064
        %v2121 = vpack.c.bf16 %v2067, %v2066
        %v2122 = vpack.c.bf16 %v2069, %v2068
        %v2123 = vpack.c.bf16 %v2071, %v2070
        %v2124 = vpack.c.bf16 %v2073, %v2072
        %v2125 = vpack.c.bf16 %v2075, %v2074
        %v2126 = vpack.c.bf16 %v2077, %v2076
        %v2127 = vpack.c.bf16 %v2079, %v2078
        %v2128 = vpack.c.bf16 %v2081, %v2080
        %v2129 = vpack.c.bf16 %v2083, %v2082
        %v2130 = vpack.c.bf16 %v2085, %v2084
        %v2131 = vpack.c.bf16 %v2087, %v2086
        %v2132 = vpack.c.bf16 %v2089, %v2088
        %v2133 = vpack.c.bf16 %v2091, %v2090
        %v2134 = vpack.c.bf16 %v2093, %v2092
        %v2135 = vpack.c.bf16 %v2095, %v2094
        %v2136 = vpack.c.bf16 %v2097, %v2096
        %v2137 = vpack.c.bf16 %v2099, %v2098
        %v2138 = vpack.c.bf16 %v2101, %v2100
        %v2139 = vpack.c.bf16 %v2103, %v2102
        %v2140 = vpack.c.bf16 %v2105, %v2104
        %v2141 = vpack.c.bf16 %v2107, %v2106
        %v2142 = vpack.c.bf16 %v2109, %v2108
        %v2143 = vpack.c.bf16 %v2111, %v2110
        %v2144 = vld [vmem:[%s7] sm:$0xf]
        %v2145 = vld [vmem:[%s7 + $0x4] sm:$0xf]
        %v2146 = vld [vmem:[%s7 + $0x8] sm:$0xf]
        %v2147 = vld [vmem:[%s7 + $0xc] sm:$0xf]
        %v2148 = vld [vmem:[%s7 + $0x10] sm:$0xf]
        %v2149 = vld [vmem:[%s7 + $0x14] sm:$0xf]
        %v2150 = vld [vmem:[%s7 + $0x18] sm:$0xf]
        %v2151 = vld [vmem:[%s7 + $0x1c] sm:$0xf]
        %v2152 = vld [vmem:[%s7 + $0x20] sm:$0xf]
        %v2153 = vld [vmem:[%s7 + $0x24] sm:$0xf]
        %v2154 = vld [vmem:[%s7 + $0x28] sm:$0xf]
        %v2155 = vld [vmem:[%s7 + $0x2c] sm:$0xf]
        %v2156 = vld [vmem:[%s7 + $0x30] sm:$0xf]
        %v2157 = vld [vmem:[%s7 + $0x34] sm:$0xf]
        %v2158 = vld [vmem:[%s7 + $0x38] sm:$0xf]
        %v2159 = vld [vmem:[%s7 + $0x3c] sm:$0xf]
        %v2160 = vld [vmem:[%s8] sm:$0x1]
        %v2162 = vlaneseq
        %v2163 = vshrl.u32 %v2162, 7
        %v2164 = vsub.s32 0, %v2163
        %v2165 = vrot.slane %v2160, %v2164
        %v2183 = vunpack.c.l.b16 %v2144
        %v2184 = vunpack.c.l.b16 %v2145
        %v2185 = vunpack.c.l.b16 %v2146
        %v2186 = vunpack.c.l.b16 %v2147
        %v2187 = vunpack.c.l.b16 %v2148
        %v2188 = vunpack.c.l.b16 %v2149
        %v2189 = vunpack.c.l.b16 %v2150
        %v2190 = vunpack.c.l.b16 %v2151
        %v2191 = vunpack.c.l.b16 %v2152
        %v2192 = vunpack.c.l.b16 %v2153
        %v2193 = vunpack.c.l.b16 %v2154
        %v2194 = vunpack.c.l.b16 %v2155
        %v2195 = vunpack.c.l.b16 %v2156
        %v2196 = vunpack.c.l.b16 %v2157
        %v2197 = vunpack.c.l.b16 %v2158
        %v2198 = vunpack.c.l.b16 %v2159
        %v2199 = vpack.c.b16 %v2184, %v2183
        %v2200 = vpack.c.b16 %v2186, %v2185
        %v2201 = vpack.c.b16 %v2188, %v2187
        %v2202 = vpack.c.b16 %v2190, %v2189
        %v2203 = vpack.c.b16 %v2192, %v2191
        %v2204 = vpack.c.b16 %v2194, %v2193
        %v2205 = vpack.c.b16 %v2196, %v2195
        %v2206 = vpack.c.b16 %v2198, %v2197
        %2215 = vmatprep.subr.bf16.mxu0 0
        %2216 = vmatpush1.bf16.msra.mxu0 %v2199
        %2217 = vmatprep.subr.bf16.mxu0 0
        %2218 = vmatpush1.bf16.msra.mxu0 %v2200
        %2219 = vmatprep.subr.bf16.mxu0 0
        %2220 = vmatpush1.bf16.msra.mxu0 %v2201
        %2221 = vmatprep.subr.bf16.mxu0 0
        %2222 = vmatpush1.bf16.msra.mxu0 %v2202
        %2223 = vmatprep.subr.bf16.mxu0 0
        %2224 = vmatpush1.bf16.msra.mxu0 %v2203
        %2225 = vmatprep.subr.bf16.mxu0 0
        %2226 = vmatpush1.bf16.msra.mxu0 %v2204
        %2227 = vmatprep.subr.bf16.mxu0 0
        %2228 = vmatpush1.bf16.msra.mxu0 %v2205
        %2229 = vmatprep.subr.bf16.mxu0 0
        %2230 = vmatpush1.bf16.msra.mxu0 %v2206
        %2231 = vmatprep.subr.bf16.mxu0 0
        %2232 = vmatpush1.bf16.msra.mxu0 0
        %2233 = vmatprep.subr.bf16.mxu0 0
        %2234 = vmatpush1.bf16.msra.mxu0 0
        %2235 = vmatprep.subr.bf16.mxu0 0
        %2236 = vmatpush1.bf16.msra.mxu0 0
        %2237 = vmatprep.subr.bf16.mxu0 0
        %2238 = vmatpush1.bf16.msra.mxu0 0
        %2239 = vmatprep.subr.bf16.mxu0 0
        %2240 = vmatpush1.bf16.msra.mxu0 0
        %2241 = vmatprep.subr.bf16.mxu0 0
        %2242 = vmatpush1.bf16.msra.mxu0 0
        %2243 = vmatprep.subr.bf16.mxu0 0
        %2244 = vmatpush1.bf16.msra.mxu0 0
        %2245 = vmatprep.subr.bf16.mxu0 0
        %2246 = vmatpush1.bf16.msra.mxu0 0
        %2247 = vmatprep.mubr.bf16.mxu0 0
        %2248 = vmatmul.mubr.bf16.gmra.mrb[0].mxu0 %v2112
        %v2249 = vpop.f32.mrb[0].mxu0
        %v2250 = vadd.f32 %v2165, %v2249
        %v2251 = vpop.f32.mrb[0].mxu0
        %v2252 = vpop.f32.mrb[0].mxu0
        %v2253 = vadd.f32 %v2165, %v2252
        %v2254 = vpop.f32.mrb[0].mxu0
        %2255 = vmatprep.mubr.bf16.mxu0 0
        %2256 = vmatmul.mubr.bf16.gmra.mrb[0].mxu0 %v2113
        %v2257 = vpop.f32.mrb[0].mxu0
        %v2258 = vadd.f32 %v2165, %v2257
        %v2259 = vpop.f32.mrb[0].mxu0
        %v2260 = vpop.f32.mrb[0].mxu0
        %v2261 = vadd.f32 %v2165, %v2260
        %v2262 = vpop.f32.mrb[0].mxu0
        %2263 = vmatprep.mubr.bf16.mxu0 0
        %2264 = vmatmul.mubr.bf16.gmra.mrb[0].mxu0 %v2114
        %v2265 = vpop.f32.mrb[0].mxu0
        %v2266 = vadd.f32 %v2165, %v2265
        %v2267 = vpop.f32.mrb[0].mxu0
        %v2268 = vpop.f32.mrb[0].mxu0
        %v2269 = vadd.f32 %v2165, %v2268
        %v2270 = vpop.f32.mrb[0].mxu0
        %2271 = vmatprep.mubr.bf16.mxu0 0
        %2272 = vmatmul.mubr.bf16.gmra.mrb[0].mxu0 %v2115
        %v2273 = vpop.f32.mrb[0].mxu0
        %v2274 = vadd.f32 %v2165, %v2273
        %v2275 = vpop.f32.mrb[0].mxu0
        %v2276 = vpop.f32.mrb[0].mxu0
        %v2277 = vadd.f32 %v2165, %v2276
        %v2278 = vpop.f32.mrb[0].mxu0
        %2279 = vmatprep.mubr.bf16.mxu0 0
        %2280 = vmatmul.mubr.bf16.gmra.mrb[0].mxu0 %v2116
        %v2281 = vpop.f32.mrb[0].mxu0
        %v2282 = vadd.f32 %v2165, %v2281
        %v2283 = vpop.f32.mrb[0].mxu0
        %v2284 = vpop.f32.mrb[0].mxu0
        %v2285 = vadd.f32 %v2165, %v2284
        %v2286 = vpop.f32.mrb[0].mxu0
        %2287 = vmatprep.mubr.bf16.mxu0 0
        %2288 = vmatmul.mubr.bf16.gmra.mrb[0].mxu0 %v2117
        %v2289 = vpop.f32.mrb[0].mxu0
        %v2290 = vadd.f32 %v2165, %v2289
        %v2291 = vpop.f32.mrb[0].mxu0
        %v2292 = vpop.f32.mrb[0].mxu0
        %v2293 = vadd.f32 %v2165, %v2292
        %v2294 = vpop.f32.mrb[0].mxu0
        %2295 = vmatprep.mubr.bf16.mxu0 0
        %2296 = vmatmul.mubr.bf16.gmra.mrb[0].mxu0 %v2118
        %v2297 = vpop.f32.mrb[0].mxu0
        %v2298 = vadd.f32 %v2165, %v2297
        %v2299 = vpop.f32.mrb[0].mxu0
        %v2300 = vpop.f32.mrb[0].mxu0
        %v2301 = vadd.f32 %v2165, %v2300
        %v2302 = vpop.f32.mrb[0].mxu0
        %2303 = vmatprep.mubr.bf16.mxu0 0
        %2304 = vmatmul.mubr.bf16.gmra.mrb[0].mxu0 %v2119
        %v2305 = vpop.f32.mrb[0].mxu0
        %v2306 = vadd.f32 %v2165, %v2305
        %v2307 = vpop.f32.mrb[0].mxu0
        %v2308 = vpop.f32.mrb[0].mxu0
        %v2309 = vadd.f32 %v2165, %v2308
        %v2310 = vpop.f32.mrb[0].mxu0
        %2311 = vmatprep.mubr.bf16.mxu0 0
        %2312 = vmatmul.mubr.bf16.gmra.mrb[0].mxu0 %v2120
        %v2313 = vpop.f32.mrb[0].mxu0
        %v2314 = vadd.f32 %v2165, %v2313
        %v2315 = vpop.f32.mrb[0].mxu0
        %v2316 = vpop.f32.mrb[0].mxu0
        %v2317 = vadd.f32 %v2165, %v2316
        %v2318 = vpop.f32.mrb[0].mxu0
        %2319 = vmatprep.mubr.bf16.mxu0 0
        %2320 = vmatmul.mubr.bf16.gmra.mrb[0].mxu0 %v2121
        %v2321 = vpop.f32.mrb[0].mxu0
        %v2322 = vadd.f32 %v2165, %v2321
        %v2323 = vpop.f32.mrb[0].mxu0
        %v2324 = vpop.f32.mrb[0].mxu0
        %v2325 = vadd.f32 %v2165, %v2324
        %v2326 = vpop.f32.mrb[0].mxu0
        %2327 = vmatprep.mubr.bf16.mxu0 0
        %2328 = vmatmul.mubr.bf16.gmra.mrb[0].mxu0 %v2122
        %v2329 = vpop.f32.mrb[0].mxu0
        %v2330 = vadd.f32 %v2165, %v2329
        %v2331 = vpop.f32.mrb[0].mxu0
        %v2332 = vpop.f32.mrb[0].mxu0
        %v2333 = vadd.f32 %v2165, %v2332
        %v2334 = vpop.f32.mrb[0].mxu0
        %2335 = vmatprep.mubr.bf16.mxu0 0
        %2336 = vmatmul.mubr.bf16.gmra.mrb[0].mxu0 %v2123
        %v2337 = vpop.f32.mrb[0].mxu0
        %v2338 = vadd.f32 %v2165, %v2337
        %v2339 = vpop.f32.mrb[0].mxu0
        %v2340 = vpop.f32.mrb[0].mxu0
        %v2341 = vadd.f32 %v2165, %v2340
        %v2342 = vpop.f32.mrb[0].mxu0
        %2343 = vmatprep.mubr.bf16.mxu0 0
        %2344 = vmatmul.mubr.bf16.gmra.mrb[0].mxu0 %v2124
        %v2345 = vpop.f32.mrb[0].mxu0
        %v2346 = vadd.f32 %v2165, %v2345
        %v2347 = vpop.f32.mrb[0].mxu0
        %v2348 = vpop.f32.mrb[0].mxu0
        %v2349 = vadd.f32 %v2165, %v2348
        %v2350 = vpop.f32.mrb[0].mxu0
        %2351 = vmatprep.mubr.bf16.mxu0 0
        %2352 = vmatmul.mubr.bf16.gmra.mrb[0].mxu0 %v2125
        %v2353 = vpop.f32.mrb[0].mxu0
        %v2354 = vadd.f32 %v2165, %v2353
        %v2355 = vpop.f32.mrb[0].mxu0
        %v2356 = vpop.f32.mrb[0].mxu0
        %v2357 = vadd.f32 %v2165, %v2356
        %v2358 = vpop.f32.mrb[0].mxu0
        %2359 = vmatprep.mubr.bf16.mxu0 0
        %2360 = vmatmul.mubr.bf16.gmra.mrb[0].mxu0 %v2126
        %v2361 = vpop.f32.mrb[0].mxu0
        %v2362 = vadd.f32 %v2165, %v2361
        %v2363 = vpop.f32.mrb[0].mxu0
        %v2364 = vpop.f32.mrb[0].mxu0
        %v2365 = vadd.f32 %v2165, %v2364
        %v2366 = vpop.f32.mrb[0].mxu0
        %2367 = vmatprep.mubr.bf16.mxu0 0
        %2368 = vmatmul.mubr.bf16.gmra.mrb[0].mxu0 %v2127
        %v2369 = vpop.f32.mrb[0].mxu0
        %v2370 = vadd.f32 %v2165, %v2369
        %v2371 = vpop.f32.mrb[0].mxu0
        %v2372 = vpop.f32.mrb[0].mxu0
        %v2373 = vadd.f32 %v2165, %v2372
        %v2374 = vpop.f32.mrb[0].mxu0
        %2375 = vmatprep.mubr.bf16.mxu0 0
        %2376 = vmatmul.mubr.bf16.gmra.mrb[0].mxu0 %v2128
        %v2377 = vpop.f32.mrb[0].mxu0
        %v2378 = vadd.f32 %v2165, %v2377
        %v2379 = vpop.f32.mrb[0].mxu0
        %v2380 = vpop.f32.mrb[0].mxu0
        %v2381 = vadd.f32 %v2165, %v2380
        %v2382 = vpop.f32.mrb[0].mxu0
        %2383 = vmatprep.mubr.bf16.mxu0 0
        %2384 = vmatmul.mubr.bf16.gmra.mrb[0].mxu0 %v2129
        %v2385 = vpop.f32.mrb[0].mxu0
        %v2386 = vadd.f32 %v2165, %v2385
        %v2387 = vpop.f32.mrb[0].mxu0
        %v2388 = vpop.f32.mrb[0].mxu0
        %v2389 = vadd.f32 %v2165, %v2388
        %v2390 = vpop.f32.mrb[0].mxu0
        %2391 = vmatprep.mubr.bf16.mxu0 0
        %2392 = vmatmul.mubr.bf16.gmra.mrb[0].mxu0 %v2130
        %v2393 = vpop.f32.mrb[0].mxu0
        %v2394 = vadd.f32 %v2165, %v2393
        %v2395 = vpop.f32.mrb[0].mxu0
        %v2396 = vpop.f32.mrb[0].mxu0
        %v2397 = vadd.f32 %v2165, %v2396
        %v2398 = vpop.f32.mrb[0].mxu0
        %2399 = vmatprep.mubr.bf16.mxu0 0
        %2400 = vmatmul.mubr.bf16.gmra.mrb[0].mxu0 %v2131
        %v2401 = vpop.f32.mrb[0].mxu0
        %v2402 = vadd.f32 %v2165, %v2401
        %v2403 = vpop.f32.mrb[0].mxu0
        %v2404 = vpop.f32.mrb[0].mxu0
        %v2405 = vadd.f32 %v2165, %v2404
        %v2406 = vpop.f32.mrb[0].mxu0
        %2407 = vmatprep.mubr.bf16.mxu0 0
        %2408 = vmatmul.mubr.bf16.gmra.mrb[0].mxu0 %v2132
        %v2409 = vpop.f32.mrb[0].mxu0
        %v2410 = vadd.f32 %v2165, %v2409
        %v2411 = vpop.f32.mrb[0].mxu0
        %v2412 = vpop.f32.mrb[0].mxu0
        %v2413 = vadd.f32 %v2165, %v2412
        %v2414 = vpop.f32.mrb[0].mxu0
        %2415 = vmatprep.mubr.bf16.mxu0 0
        %2416 = vmatmul.mubr.bf16.gmra.mrb[0].mxu0 %v2133
        %v2417 = vpop.f32.mrb[0].mxu0
        %v2418 = vadd.f32 %v2165, %v2417
        %v2419 = vpop.f32.mrb[0].mxu0
        %v2420 = vpop.f32.mrb[0].mxu0
        %v2421 = vadd.f32 %v2165, %v2420
        %v2422 = vpop.f32.mrb[0].mxu0
        %2423 = vmatprep.mubr.bf16.mxu0 0
        %2424 = vmatmul.mubr.bf16.gmra.mrb[0].mxu0 %v2134
        %v2425 = vpop.f32.mrb[0].mxu0
        %v2426 = vadd.f32 %v2165, %v2425
        %v2427 = vpop.f32.mrb[0].mxu0
        %v2428 = vpop.f32.mrb[0].mxu0
        %v2429 = vadd.f32 %v2165, %v2428
        %v2430 = vpop.f32.mrb[0].mxu0
        %2431 = vmatprep.mubr.bf16.mxu0 0
        %2432 = vmatmul.mubr.bf16.gmra.mrb[0].mxu0 %v2135
        %v2433 = vpop.f32.mrb[0].mxu0
        %v2434 = vadd.f32 %v2165, %v2433
        %v2435 = vpop.f32.mrb[0].mxu0
        %v2436 = vpop.f32.mrb[0].mxu0
        %v2437 = vadd.f32 %v2165, %v2436
        %v2438 = vpop.f32.mrb[0].mxu0
        %2439 = vmatprep.mubr.bf16.mxu0 0
        %2440 = vmatmul.mubr.bf16.gmra.mrb[0].mxu0 %v2136
        %v2441 = vpop.f32.mrb[0].mxu0
        %v2442 = vadd.f32 %v2165, %v2441
        %v2443 = vpop.f32.mrb[0].mxu0
        %v2444 = vpop.f32.mrb[0].mxu0
        %v2445 = vadd.f32 %v2165, %v2444
        %v2446 = vpop.f32.mrb[0].mxu0
        %2447 = vmatprep.mubr.bf16.mxu0 0
        %2448 = vmatmul.mubr.bf16.gmra.mrb[0].mxu0 %v2137
        %v2449 = vpop.f32.mrb[0].mxu0
        %v2450 = vadd.f32 %v2165, %v2449
        %v2451 = vpop.f32.mrb[0].mxu0
        %v2452 = vpop.f32.mrb[0].mxu0
        %v2453 = vadd.f32 %v2165, %v2452
        %v2454 = vpop.f32.mrb[0].mxu0
        %2455 = vmatprep.mubr.bf16.mxu0 0
        %2456 = vmatmul.mubr.bf16.gmra.mrb[0].mxu0 %v2138
        %v2457 = vpop.f32.mrb[0].mxu0
        %v2458 = vadd.f32 %v2165, %v2457
        %v2459 = vpop.f32.mrb[0].mxu0
        %v2460 = vpop.f32.mrb[0].mxu0
        %v2461 = vadd.f32 %v2165, %v2460
        %v2462 = vpop.f32.mrb[0].mxu0
        %2463 = vmatprep.mubr.bf16.mxu0 0
        %2464 = vmatmul.mubr.bf16.gmra.mrb[0].mxu0 %v2139
        %v2465 = vpop.f32.mrb[0].mxu0
        %v2466 = vadd.f32 %v2165, %v2465
        %v2467 = vpop.f32.mrb[0].mxu0
        %v2468 = vpop.f32.mrb[0].mxu0
        %v2469 = vadd.f32 %v2165, %v2468
        %v2470 = vpop.f32.mrb[0].mxu0
        %2471 = vmatprep.mubr.bf16.mxu0 0
        %2472 = vmatmul.mubr.bf16.gmra.mrb[0].mxu0 %v2140
        %v2473 = vpop.f32.mrb[0].mxu0
        %v2474 = vadd.f32 %v2165, %v2473
        %v2475 = vpop.f32.mrb[0].mxu0
        %v2476 = vpop.f32.mrb[0].mxu0
        %v2477 = vadd.f32 %v2165, %v2476
        %v2478 = vpop.f32.mrb[0].mxu0
        %2479 = vmatprep.mubr.bf16.mxu0 0
        %2480 = vmatmul.mubr.bf16.gmra.mrb[0].mxu0 %v2141
        %v2481 = vpop.f32.mrb[0].mxu0
        %v2482 = vadd.f32 %v2165, %v2481
        %v2483 = vpop.f32.mrb[0].mxu0
        %v2484 = vpop.f32.mrb[0].mxu0
        %v2485 = vadd.f32 %v2165, %v2484
        %v2486 = vpop.f32.mrb[0].mxu0
        %2487 = vmatprep.mubr.bf16.mxu0 0
        %2488 = vmatmul.mubr.bf16.gmra.mrb[0].mxu0 %v2142
        %v2489 = vpop.f32.mrb[0].mxu0
        %v2490 = vadd.f32 %v2165, %v2489
        %v2491 = vpop.f32.mrb[0].mxu0
        %v2492 = vpop.f32.mrb[0].mxu0
        %v2493 = vadd.f32 %v2165, %v2492
        %v2494 = vpop.f32.mrb[0].mxu0
        %2495 = vmatprep.mubr.bf16.mxu0 0
        %2496 = vmatmul.mubr.bf16.gmra.mrb[0].mxu0 %v2143
        %v2497 = vpop.f32.mrb[0].mxu0
        %v2498 = vadd.f32 %v2165, %v2497
        %v2499 = vpop.f32.mrb[0].mxu0
        %v2500 = vpop.f32.mrb[0].mxu0
        %v2501 = vadd.f32 %v2165, %v2500
        %v2502 = vpop.f32.mrb[0].mxu0
        %2503 = vdwg.mxu0
        %2504 = vst [vmem:[%s364] sm:$0xff] %v2048
        %2505 = vst [vmem:[%s364 + $0x8] sm:$0xff] %v2049
        %2506 = vst [vmem:[%s364 + $0x10] sm:$0xff] %v2050
        %2507 = vst [vmem:[%s364 + $0x18] sm:$0xff] %v2051
        %2508 = vst [vmem:[%s364 + $0x20] sm:$0xff] %v2052
        %2509 = vst [vmem:[%s364 + $0x28] sm:$0xff] %v2053
        %2510 = vst [vmem:[%s364 + $0x30] sm:$0xff] %v2054
        %2511 = vst [vmem:[%s364 + $0x38] sm:$0xff] %v2055
        %2512 = vst [vmem:[%s364 + $0x40] sm:$0xff] %v2056
        %2513 = vst [vmem:[%s364 + $0x48] sm:$0xff] %v2057
        %2514 = vst [vmem:[%s364 + $0x50] sm:$0xff] %v2058
        %2515 = vst [vmem:[%s364 + $0x58] sm:$0xff] %v2059
        %2516 = vst [vmem:[%s364 + $0x60] sm:$0xff] %v2060
        %2517 = vst [vmem:[%s364 + $0x68] sm:$0xff] %v2061
        %2518 = vst [vmem:[%s364 + $0x70] sm:$0xff] %v2062
        %2519 = vst [vmem:[%s364 + $0x78] sm:$0xff] %v2063
        %2520 = vst [vmem:[%s364 + $0x80] sm:$0xff] %v2064
        %2521 = vst [vmem:[%s364 + $0x88] sm:$0xff] %v2065
        %2522 = vst [vmem:[%s364 + $0x90] sm:$0xff] %v2066
        %2523 = vst [vmem:[%s364 + $0x98] sm:$0xff] %v2067
        %2524 = vst [vmem:[%s364 + $0xa0] sm:$0xff] %v2068
        %2525 = vst [vmem:[%s364 + $0xa8] sm:$0xff] %v2069
        %2526 = vst [vmem:[%s364 + $0xb0] sm:$0xff] %v2070
        %2527 = vst [vmem:[%s364 + $0xb8] sm:$0xff] %v2071
        %2528 = vst [vmem:[%s364 + $0xc0] sm:$0xff] %v2072
        %2529 = vst [vmem:[%s364 + $0xc8] sm:$0xff] %v2073
        %2530 = vst [vmem:[%s364 + $0xd0] sm:$0xff] %v2074
        %2531 = vst [vmem:[%s364 + $0xd8] sm:$0xff] %v2075
        %2532 = vst [vmem:[%s364 + $0xe0] sm:$0xff] %v2076
        %2533 = vst [vmem:[%s364 + $0xe8] sm:$0xff] %v2077
        %2534 = vst [vmem:[%s364 + $0xf0] sm:$0xff] %v2078
        %2535 = vst [vmem:[%s364 + $0xf8] sm:$0xff] %v2079
        %2536 = vst [vmem:[%s364 + $0x100] sm:$0xff] %v2080
        %2537 = vst [vmem:[%s364 + $0x108] sm:$0xff] %v2081
        %2538 = vst [vmem:[%s364 + $0x110] sm:$0xff] %v2082
        %2539 = vst [vmem:[%s364 + $0x118] sm:$0xff] %v2083
        %2540 = vst [vmem:[%s364 + $0x120] sm:$0xff] %v2084
        %2541 = vst [vmem:[%s364 + $0x128] sm:$0xff] %v2085
        %2542 = vst [vmem:[%s364 + $0x130] sm:$0xff] %v2086
        %2543 = vst [vmem:[%s364 + $0x138] sm:$0xff] %v2087
        %2544 = vst [vmem:[%s364 + $0x140] sm:$0xff] %v2088
        %2545 = vst [vmem:[%s364 + $0x148] sm:$0xff] %v2089
        %2546 = vst [vmem:[%s364 + $0x150] sm:$0xff] %v2090
        %2547 = vst [vmem:[%s364 + $0x158] sm:$0xff] %v2091
        %2548 = vst [vmem:[%s364 + $0x160] sm:$0xff] %v2092
        %2549 = vst [vmem:[%s364 + $0x168] sm:$0xff] %v2093
        %2550 = vst [vmem:[%s364 + $0x170] sm:$0xff] %v2094
        %2551 = vst [vmem:[%s364 + $0x178] sm:$0xff] %v2095
        %2552 = vst [vmem:[%s364 + $0x180] sm:$0xff] %v2096
        %2553 = vst [vmem:[%s364 + $0x188] sm:$0xff] %v2097
        %2554 = vst [vmem:[%s364 + $0x190] sm:$0xff] %v2098
        %2555 = vst [vmem:[%s364 + $0x198] sm:$0xff] %v2099
        %2556 = vst [vmem:[%s364 + $0x1a0] sm:$0xff] %v2100
        %2557 = vst [vmem:[%s364 + $0x1a8] sm:$0xff] %v2101
        %2558 = vst [vmem:[%s364 + $0x1b0] sm:$0xff] %v2102
        %2559 = vst [vmem:[%s364 + $0x1b8] sm:$0xff] %v2103
        %2560 = vst [vmem:[%s364 + $0x1c0] sm:$0xff] %v2104
        %2561 = vst [vmem:[%s364 + $0x1c8] sm:$0xff] %v2105
        %2562 = vst [vmem:[%s364 + $0x1d0] sm:$0xff] %v2106
        %2563 = vst [vmem:[%s364 + $0x1d8] sm:$0xff] %v2107
        %2564 = vst [vmem:[%s364 + $0x1e0] sm:$0xff] %v2108
        %2565 = vst [vmem:[%s364 + $0x1e8] sm:$0xff] %v2109
        %2566 = vst [vmem:[%s364 + $0x1f0] sm:$0xff] %v2110
        %2567 = vst [vmem:[%s364 + $0x1f8] sm:$0xff] %v2111
        %2568 = vst [vmem:[%s357] sm:$0xff] %v2250
        %2569 = vst [vmem:[%s357 + $0x8] sm:$0xff] %v2253
        %2570 = vst [vmem:[%s357 + $0x10] sm:$0xff] %v2258
        %2571 = vst [vmem:[%s357 + $0x18] sm:$0xff] %v2261
        %2572 = vst [vmem:[%s357 + $0x20] sm:$0xff] %v2266
        %2573 = vst [vmem:[%s357 + $0x28] sm:$0xff] %v2269
        %2574 = vst [vmem:[%s357 + $0x30] sm:$0xff] %v2274
        %2575 = vst [vmem:[%s357 + $0x38] sm:$0xff] %v2277
        %2576 = vst [vmem:[%s357 + $0x40] sm:$0xff] %v2282
        %2577 = vst [vmem:[%s357 + $0x48] sm:$0xff] %v2285
        %2578 = vst [vmem:[%s357 + $0x50] sm:$0xff] %v2290
        %2579 = vst [vmem:[%s357 + $0x58] sm:$0xff] %v2293
        %2580 = vst [vmem:[%s357 + $0x60] sm:$0xff] %v2298
        %2581 = vst [vmem:[%s357 + $0x68] sm:$0xff] %v2301
        %2582 = vst [vmem:[%s357 + $0x70] sm:$0xff] %v2306
        %2583 = vst [vmem:[%s357 + $0x78] sm:$0xff] %v2309
        %2584 = vst [vmem:[%s357 + $0x80] sm:$0xff] %v2314
        %2585 = vst [vmem:[%s357 + $0x88] sm:$0xff] %v2317
        %2586 = vst [vmem:[%s357 + $0x90] sm:$0xff] %v2322
        %2587 = vst [vmem:[%s357 + $0x98] sm:$0xff] %v2325
        %2588 = vst [vmem:[%s357 + $0xa0] sm:$0xff] %v2330
        %2589 = vst [vmem:[%s357 + $0xa8] sm:$0xff] %v2333
        %2590 = vst [vmem:[%s357 + $0xb0] sm:$0xff] %v2338
        %2591 = vst [vmem:[%s357 + $0xb8] sm:$0xff] %v2341
        %2592 = vst [vmem:[%s357 + $0xc0] sm:$0xff] %v2346
        %2593 = vst [vmem:[%s357 + $0xc8] sm:$0xff] %v2349
        %2594 = vst [vmem:[%s357 + $0xd0] sm:$0xff] %v2354
        %2595 = vst [vmem:[%s357 + $0xd8] sm:$0xff] %v2357
        %2596 = vst [vmem:[%s357 + $0xe0] sm:$0xff] %v2362
        %2597 = vst [vmem:[%s357 + $0xe8] sm:$0xff] %v2365
        %2598 = vst [vmem:[%s357 + $0xf0] sm:$0xff] %v2370
        %2599 = vst [vmem:[%s357 + $0xf8] sm:$0xff] %v2373
        %2600 = vst [vmem:[%s357 + $0x100] sm:$0xff] %v2378
        %2601 = vst [vmem:[%s357 + $0x108] sm:$0xff] %v2381
        %2602 = vst [vmem:[%s357 + $0x110] sm:$0xff] %v2386
        %2603 = vst [vmem:[%s357 + $0x118] sm:$0xff] %v2389
        %2604 = vst [vmem:[%s357 + $0x120] sm:$0xff] %v2394
        %2605 = vst [vmem:[%s357 + $0x128] sm:$0xff] %v2397
        %2606 = vst [vmem:[%s357 + $0x130] sm:$0xff] %v2402
        %2607 = vst [vmem:[%s357 + $0x138] sm:$0xff] %v2405
        %2608 = vst [vmem:[%s357 + $0x140] sm:$0xff] %v2410
        %2609 = vst [vmem:[%s357 + $0x148] sm:$0xff] %v2413
        %2610 = vst [vmem:[%s357 + $0x150] sm:$0xff] %v2418
        %2611 = vst [vmem:[%s357 + $0x158] sm:$0xff] %v2421
        %2612 = vst [vmem:[%s357 + $0x160] sm:$0xff] %v2426
        %2613 = vst [vmem:[%s357 + $0x168] sm:$0xff] %v2429
        %2614 = vst [vmem:[%s357 + $0x170] sm:$0xff] %v2434
        %2615 = vst [vmem:[%s357 + $0x178] sm:$0xff] %v2437
        %2616 = vst [vmem:[%s357 + $0x180] sm:$0xff] %v2442
        %2617 = vst [vmem:[%s357 + $0x188] sm:$0xff] %v2445
        %2618 = vst [vmem:[%s357 + $0x190] sm:$0xff] %v2450
        %2619 = vst [vmem:[%s357 + $0x198] sm:$0xff] %v2453
        %2620 = vst [vmem:[%s357 + $0x1a0] sm:$0xff] %v2458
        %2621 = vst [vmem:[%s357 + $0x1a8] sm:$0xff] %v2461
        %2622 = vst [vmem:[%s357 + $0x1b0] sm:$0xff] %v2466
        %2623 = vst [vmem:[%s357 + $0x1b8] sm:$0xff] %v2469
        %2624 = vst [vmem:[%s357 + $0x1c0] sm:$0xff] %v2474
        %2625 = vst [vmem:[%s357 + $0x1c8] sm:$0xff] %v2477
        %2626 = vst [vmem:[%s357 + $0x1d0] sm:$0xff] %v2482
        %2627 = vst [vmem:[%s357 + $0x1d8] sm:$0xff] %v2485
        %2628 = vst [vmem:[%s357 + $0x1e0] sm:$0xff] %v2490
        %2629 = vst [vmem:[%s357 + $0x1e8] sm:$0xff] %v2493
        %2630 = vst [vmem:[%s357 + $0x1f0] sm:$0xff] %v2498
        %2631 = vst [vmem:[%s357 + $0x1f8] sm:$0xff] %v2501
        %s2632 = sand.u32 %s230, 1
        %s2633 = scalar_lea.sflag [#allocation3], %s2632
        %s2634 = sand.u32 %s230, 1
        %s2635 = smul.addr %s2634, 512
        %s2636 = scalar_lea.vmem [#allocation2], %s2635
        %s2637 = sand.u32 %s256, 1
        %s2638 = scalar_lea.sflag [#allocation5], %s2637
        %s2639 = sand.u32 %s256, 1
        %s2640 = smul.addr %s2639, 512
        %s2641 = scalar_lea.vmem [#allocation4], %s2640
        // Predicated region
        $region57: #{tpu_custom_call.1} parent=55 // pred_check
          %p2642 = pneg %p240
        $region58: #{tpu_custom_call.1} parent=55 // pred_check_branch
          %2644 = sbr.rel (%p2642) target = $region60
        $region59: #{tpu_custom_call.1} parent=55 // pred_region
          %s2645 = smul.u32 64, %s28
          %s2647 = ssub.s32 8192, 8192
          %2648 = vsyncadd %s2633, %s2647
          %s2649 = smul.addr %s2645, 128
          %s2650 = scalar_lea.hbm %s9, %s2649
          %s2651 = sshll.u32 %s2636, 4
          %s2652 = int_to_ptr.vmem [resolvable:$true] %s2651
          %2657 = dma.vmem_to_hbm [thread:$0]  %s2652, 8192, %s2650, %s2633, 128, 128, 8
        $region60: #{tpu_custom_call.1} parent=55 // pred_fallthru
          _
        // Predicated region
        $region61: #{tpu_custom_call.1} parent=55 // pred_check
          %p2658 = pneg %p266
        $region62: #{tpu_custom_call.1} parent=55 // pred_check_branch
          %2660 = sbr.rel (%p2658) target = $region64
        $region63: #{tpu_custom_call.1} parent=55 // pred_region
          %s2661 = smul.u32 64, %s28
          %s2663 = ssub.s32 8192, 8192
          %2664 = vsyncadd %s2638, %s2663
          %s2665 = smul.addr %s2661, 128
          %s2666 = scalar_lea.hbm %s10, %s2665
          %s2667 = sshll.u32 %s2641, 4
          %s2668 = int_to_ptr.vmem [resolvable:$true] %s2667
          %2673 = dma.vmem_to_hbm [thread:$0]  %s2668, 8192, %s2666, %s2638, 128, 128, 8
        $region64: #{tpu_custom_call.1} parent=55 // pred_fallthru
          _
      $region56: #{tpu_custom_call.1} parent=5 // pred_fallthru
        _
      %p2674 = scmp.le.s32.totalorder 2, %s23
      // Predicated region
      $region65: #{tpu_custom_call.1} parent=5 // pred_check
        %p2675 = pneg %p2674
      $region66: #{tpu_custom_call.1} parent=5 // pred_check_branch
        %2677 = sbr.rel (%p2675) target = $region68
      $region67: #{tpu_custom_call.1} parent=5 // pred_region
        %s2678 = ssub.s32 %s23, 2
        // Predicated region
        $region69: #{tpu_custom_call.1} parent=67 // pred_check
          %p2679 = pneg %p246
        $region70: #{tpu_custom_call.1} parent=67 // pred_check_branch
          %2681 = sbr.rel (%p2679) target = $region72
        $region71: #{tpu_custom_call.1} parent=67 // pred_region
          %s2682 = sand.u32 %s231, 1
          %s2683 = scalar_lea.sflag [#allocation3], %s2682
          %s2684 = sand.u32 %s231, 1
          %s2685 = smul.addr %s2684, 512
          %s2686 = scalar_lea.vmem [#allocation2], %s2685
          %2687 = dma.done %s2683, 8192
        $region72: #{tpu_custom_call.1} parent=67 // pred_fallthru
          _
        // Predicated region
        $region73: #{tpu_custom_call.1} parent=67 // pred_check
          %p2688 = pneg %p272
        $region74: #{tpu_custom_call.1} parent=67 // pred_check_branch
          %2690 = sbr.rel (%p2688) target = $region76
        $region75: #{tpu_custom_call.1} parent=67 // pred_region
          %s2691 = sand.u32 %s257, 1
          %s2692 = scalar_lea.sflag [#allocation5], %s2691
          %s2693 = sand.u32 %s257, 1
          %s2694 = smul.addr %s2693, 512
          %s2695 = scalar_lea.vmem [#allocation4], %s2694
          %2696 = dma.done %s2692, 8192
        $region76: #{tpu_custom_call.1} parent=67 // pred_fallthru
          _
      $region68: #{tpu_custom_call.1} parent=5 // pred_fallthru
        _
    $region6: #{tpu_custom_call.1} parent=1 // loop_footer
      %s27 = sadd.s32 1, %s23
    $region7: #{tpu_custom_call.1} parent=1 // loop_footer_branch
      %22 = sbr.rel target = $region3
    $region8: #{tpu_custom_call.1} parent=1 // loop_exit
      _
    %2697 = vsyncpa [#allocation3], 1
    %s2698 = scalar_lea.sflag [#allocation3], 1
    %2699 = vsyncpa %s2698, 1
    %2700 = vsyncpa [#allocation5], 1
    %s2701 = scalar_lea.sflag [#allocation5], 1
    %2702 = vsyncpa %s2701, 1

</llo_original>
